<compile_context>
chip_gen: v6e
topology: v6e:2x2x1
jax: 0.10.0
libtpu: 0.0.40
codegen_flags: <defaults>
</compile_context>

<pallas_src>
import jax
import jax.numpy as jnp
from jax import lax
from jax.experimental import pallas as pl
from jax.experimental.pallas import tpu as pltpu


# Cast MXU operands (x, h, GRU weights) to bf16 while keeping f32 accumulation
# and f32 elementwise gate math.  Beneficial on v5e, v6e and v7x alike (all
# have bf16-native MXUs).  The one-hot embedding dot is kept in f32 so the
# row selection stays exact.
USE_BF16_MATMUL = True


def _bf16(x):
    return x.astype(jnp.bfloat16) if USE_BF16_MATMUL else x


def _dot(a, b):
    return jnp.dot(a, b, preferred_element_type=jnp.float32)


def gru_fcn_kernel(tok_ref,   # (T*B, 1) i32  time-major token ids (row = t*B+b)
                   lens_ref,  # (B, 1)   i32  per-sequence valid lengths
                   emb_ref,   # (V, E)   f32  embedding table
                   wih_ref,   # (L, E, 3E) f32  input->gates,  lanes = [r|z|n]
                   whh_ref,   # (L, E, 3E) f32  hidden->gates, lanes = [r|z|n]
                   bih_ref,   # (L, 1, 3E) f32
                   bhh_ref,   # (L, 1, 3E) f32
                   wfc_ref,   # (E, 4) f32   final linear (pre-transposed)
                   bfc_ref,   # (1, 4) f32
                   out_ref):  # (B, 4) f32
    TB = tok_ref.shape[0]
    B = lens_ref.shape[0]
    T = TB // B
    V, E = emb_ref.shape
    L = wih_ref.shape[0]
    G = 3 * E

    # ---- fused embedding lookup: one-hot (T*B,V) @ (V,E) on the MXU.
    # Rows are exact 0/1 and the dot is f32, so this is an exact row
    # selection; the result is already time-major.
    # TODO(synk): at production vocab sizes replace with a scalar-prefetch row
    # gather (PrefetchScalarGridSpec + pl.Element BlockSpec on emb) so only
    # the T*B needed rows are VMEM-resident (matters on v7x's 64 MiB VMEM).
    iota_v = lax.broadcasted_iota(jnp.int32, (TB, V), 1)
    onehot = (tok_ref[...] == iota_v).astype(jnp.float32)
    x_all = _dot(onehot, emb_ref[...])                  # (T*B, E) f32, exact

    # ---- packed-sequence masks (freeze h once t >= length[b]), hoisted once.
    lens = lens_ref[...]                                # (B, 1) i32
    masks = [lens > t for t in range(T)]                # T x (B, 1) bool

    # ---- per-layer weights cast once, biases pre-broadcast once (outside the
    # unrolled loops; broadcast_in_dim is not CSE'd by JAX).
    wih_c = [_bf16(wih_ref[l]) for l in range(L)]       # (E, 3E) bf16
    whh_c = [_bf16(whh_ref[l]) for l in range(L)]       # (E, 3E) bf16
    bih_b = [jnp.broadcast_to(bih_ref[l], (B, G)) for l in range(L)]
    bhh_b = [jnp.broadcast_to(bhh_ref[l], (B, G)) for l in range(L)]

    # ---- layer-0 input projection hoisted off the recurrent chain: one
    # batched (T*B,E)x(E,3E) dot covering every timestep and all three gates.
    gi0 = _dot(_bf16(x_all), wih_c[0]) + bih_ref[0]     # (T*B, 3E)

    # ---- wavefront schedule over (t, l): layer l step t only needs layer l
    # step t-1 and layer l-1 step t, so the dependent chain is T+L-1 fused
    # GRU cells and independent cells overlap on the MXU.
    h = [jnp.zeros((B, E), jnp.float32) for _ in range(L)]
    for t in range(T):                                  # fully unrolled
        row = t * B                                     # sublane-aligned
        for l in range(L):                              # static layer loop
            if l == 0:
                gi = gi0[row:row + B]                   # precomputed
            else:
                # per-step input projection from the layer below (off this
                # layer's own recurrence chain).
                gi = _dot(_bf16(h[l - 1]), wih_c[l]) + bih_b[l]
            # single fused 3E-wide recurrent matmul on the critical path.
            gh = _dot(_bf16(h[l]), whh_c[l]) + bhh_b[l]
            rz = jax.nn.sigmoid(gi[:, :2 * E] + gh[:, :2 * E])   # r|z slab
            r = rz[:, :E]
            z = rz[:, E:]
            n = jnp.tanh(gi[:, 2 * E:] + r * gh[:, 2 * E:])
            h_new = n + z * (h[l] - n)                  # == (1-z)*n + z*h
            h[l] = jnp.where(masks[t], h_new, h[l])     # freeze t >= len[b]

    # fcn1 on hidden[-1] (last layer's final hidden state), kept in f32.
    out_ref[...] = _dot(h[L - 1], wfc_ref[...]) + bfc_ref[...]


def recurrent_network_forward(x, params):
    """x: (B, T) int32 token ids (0 = pad). Returns (B, 4) f32 logits."""
    emb, wih, whh, bih, bhh, wfc, bfc = (params["emb"], params["wih"],
                                         params["whh"], params["bih"],
                                         params["bhh"], params["wfc"],
                                         params["bfc"])
    B, T = x.shape

    # Tiny scalar glue only: lengths a la torch.count_nonzero and time-major
    # token ids.  Embedding gather / transpose happen inside the kernel.
    lengths = jnp.count_nonzero(x, axis=1).astype(jnp.int32).reshape(B, 1)
    tok_tm = jnp.transpose(x).reshape(T * B, 1).astype(jnp.int32)

    vmem = pl.BlockSpec(memory_space=pltpu.MemorySpace.VMEM)
    # TODO(synk): at larger batch add a leading batch grid axis with
    # dimension_semantics=("parallel",) so v7x's 2 TensorCores both get work;
    # B can grow toward the MXU height (128/256) at near-flat per-step cost.
    out = pl.pallas_call(
        gru_fcn_kernel,
        out_shape=jax.ShapeDtypeStruct((B, 4), jnp.float32),
        in_specs=[vmem] * 9,
        out_specs=vmem,
        # Everything is VMEM-resident (no grid): < 1 MiB at these shapes.
        compiler_params=pltpu.CompilerParams(vmem_limit_bytes=32 * 1024 * 1024),
    )(tok_tm, lengths, emb, wih, whh, bih, bhh, wfc, bfc)
    return out


def reference_forward(x, params):
    """Pure-JAX reference matching PyTorch GRU + pack_padded_sequence.

    Applies the same bf16 operand casts for the matmuls as the kernel so the
    comparison validates the GRU/masking semantics tightly.
    """
    emb, wih, whh, bih, bhh, wfc, bfc = (params["emb"], params["wih"],
                                         params["whh"], params["bih"],
                                         params["bhh"], params["wfc"],
                                         params["bfc"])
    B, T = x.shape
    E = emb.shape[1]
    L = wih.shape[0]
    lengths = jnp.count_nonzero(x, axis=1).astype(jnp.int32)
    seq = emb[x]                                        # (B, T, E)
    h_last = jnp.zeros((B, E), jnp.float32)
    for l in range(L):
        wih_l = _bf16(wih[l])
        whh_l = _bf16(whh[l])

        def step(h, xt_t, l=l, wih_l=wih_l, whh_l=whh_l):
            xt, t = xt_t
            gi = _dot(_bf16(xt), wih_l) + bih[l]
            gh = _dot(_bf16(h), whh_l) + bhh[l]
            rz = jax.nn.sigmoid(gi[:, :2 * E] + gh[:, :2 * E])
            r = rz[:, :E]
            z = rz[:, E:]
            n = jnp.tanh(gi[:, 2 * E:] + r * gh[:, 2 * E:])
            h_new = n + z * (h - n)
            h_next = jnp.where((t < lengths)[:, None], h_new, h)
            return h_next, h_next

        xs = (jnp.transpose(seq, (1, 0, 2)), jnp.arange(T))
        h_last, outs = lax.scan(step, jnp.zeros((B, E), jnp.float32), xs)
        seq = jnp.transpose(outs, (1, 0, 2))
    return h_last @ wfc + bfc


def init_params(key, vocab_size, embedding_dim, num_layers):
    E, L = embedding_dim, num_layers
    ks = jax.random.split(key, 7)
    s = 1.0 / jnp.sqrt(E)
    emb = jax.random.normal(ks[0], (vocab_size, E), jnp.float32)
    # PyTorch GRU stores weight_ih_l{k}: (3E, in) with gates stacked [r; z; n].
    # We keep the transpose with the gates concatenated along the output/lane
    # dim: wih[l] == W_ih_l.T laid out so lanes [0:E)=r, [E:2E)=z, [2E:3E)=n.
    # (input size == E for all layers.)
    wih = jax.random.uniform(ks[1], (L, E, 3 * E), jnp.float32, -s, s)
    whh = jax.random.uniform(ks[2], (L, E, 3 * E), jnp.float32, -s, s)
    bih = jax.random.uniform(ks[3], (L, 1, 3 * E), jnp.float32, -s, s)
    bhh = jax.random.uniform(ks[4], (L, 1, 3 * E), jnp.float32, -s, s)
    wfc = jax.random.uniform(ks[5], (E, 4), jnp.float32, -s, s)
    bfc = jax.random.uniform(ks[6], (1, 4), jnp.float32, -s, s)
    return dict(emb=emb, wih=wih, whh=whh, bih=bih, bhh=bhh, wfc=wfc, bfc=bfc)


if __name__ == "__main__":
    key = jax.random.PRNGKey(0)
    VOCAB, E, L = 16, 32, 2
    B, T = 8, 8

    kp, kt, kl = jax.random.split(key, 3)
    params = init_params(kp, VOCAB, E, L)

    # token ids in [1, VOCAB), zero-padded after a random valid length >= 1
    tokens = jax.random.randint(kt, (B, T), 1, VOCAB, dtype=jnp.int32)
    lens = jax.random.randint(kl, (B,), 1, T + 1, dtype=jnp.int32)
    mask = jnp.arange(T)[None, :] < lens[:, None]
    x = jnp.where(mask, tokens, 0)

    out = recurrent_network_forward(x, params)
    out = jax.block_until_ready(out)

    ref = reference_forward(x, params)
    assert out.shape == (B, 4)
    assert jnp.allclose(out, ref, atol=2e-3, rtol=2e-3), (out, ref)
    print("KERNEL_OK")
</pallas_src>

<mosaic_0001>
module attributes {stable_mosaic.version = 11 : i64} {
  func.func @gru_fcn_kernel(%arg0: memref<64x1xi32, #tpu.memory_space<vmem>>, %arg1: memref<8x1xi32, #tpu.memory_space<vmem>>, %arg2: memref<16x32xf32, #tpu.memory_space<vmem>>, %arg3: memref<2x32x96xf32, #tpu.memory_space<vmem>>, %arg4: memref<2x32x96xf32, #tpu.memory_space<vmem>>, %arg5: memref<2x1x96xf32, #tpu.memory_space<vmem>>, %arg6: memref<2x1x96xf32, #tpu.memory_space<vmem>>, %arg7: memref<32x4xf32, #tpu.memory_space<vmem>>, %arg8: memref<1x4xf32, #tpu.memory_space<vmem>>, %arg9: memref<8x4xf32, #tpu.memory_space<vmem>>) attributes {dimension_semantics = [], scalar_prefetch = 0 : i64, scratch_operands = 0 : i64, tpu.core_type = #tpu.core_type<tc>} {
    %0 = tpu.iota {dimensions = array<i32: 1>} : vector<64x16xi32>
    %c0 = arith.constant 0 : index
    %c0_0 = arith.constant 0 : index
    %1 = vector.load %arg0[%c0, %c0_0] : memref<64x1xi32, #tpu.memory_space<vmem>>, vector<64x1xi32>
    %2 = vector.broadcast %1 : vector<64x1xi32> to vector<64x16xi32>
    %3 = arith.cmpi eq, %2, %0 : vector<64x16xi32>
    %4 = arith.extui %3 : vector<64x16xi1> to vector<64x16xi32>
    %5 = arith.sitofp %4 : vector<64x16xi32> to vector<64x16xf32>
    %c0_1 = arith.constant 0 : index
    %c0_2 = arith.constant 0 : index
    %6 = vector.load %arg2[%c0_1, %c0_2] : memref<16x32xf32, #tpu.memory_space<vmem>>, vector<16x32xf32>
    %cst = arith.constant dense<0.000000e+00> : vector<64x32xf32>
    %7 = tpu.matmul %5, %6, %cst {dimension_numbers = #tpu.dot_dimension_numbers<[1], [0], [0], [1], [0, 0, 1, 1], [], []>} : vector<64x16xf32>, vector<16x32xf32>, vector<64x32xf32> -> vector<64x32xf32>
    %c0_3 = arith.constant 0 : index
    %c0_4 = arith.constant 0 : index
    %8 = vector.load %arg1[%c0_3, %c0_4] : memref<8x1xi32, #tpu.memory_space<vmem>>, vector<8x1xi32>
    %c0_i32 = arith.constant 0 : i32
    %9 = vector.broadcast %c0_i32 : i32 to vector<8x1xi32>
    %10 = arith.cmpi sgt, %8, %9 : vector<8x1xi32>
    %c1_i32 = arith.constant 1 : i32
    %11 = vector.broadcast %c1_i32 : i32 to vector<8x1xi32>
    %12 = arith.cmpi sgt, %8, %11 : vector<8x1xi32>
    %c2_i32 = arith.constant 2 : i32
    %13 = vector.broadcast %c2_i32 : i32 to vector<8x1xi32>
    %14 = arith.cmpi sgt, %8, %13 : vector<8x1xi32>
    %c3_i32 = arith.constant 3 : i32
    %15 = vector.broadcast %c3_i32 : i32 to vector<8x1xi32>
    %16 = arith.cmpi sgt, %8, %15 : vector<8x1xi32>
    %c4_i32 = arith.constant 4 : i32
    %17 = vector.broadcast %c4_i32 : i32 to vector<8x1xi32>
    %18 = arith.cmpi sgt, %8, %17 : vector<8x1xi32>
    %c5_i32 = arith.constant 5 : i32
    %19 = vector.broadcast %c5_i32 : i32 to vector<8x1xi32>
    %20 = arith.cmpi sgt, %8, %19 : vector<8x1xi32>
    %c6_i32 = arith.constant 6 : i32
    %21 = vector.broadcast %c6_i32 : i32 to vector<8x1xi32>
    %22 = arith.cmpi sgt, %8, %21 : vector<8x1xi32>
    %c7_i32 = arith.constant 7 : i32
    %23 = vector.broadcast %c7_i32 : i32 to vector<8x1xi32>
    %24 = arith.cmpi sgt, %8, %23 : vector<8x1xi32>
    %c0_5 = arith.constant 0 : index
    %c0_6 = arith.constant 0 : index
    %c0_7 = arith.constant 0 : index
    %25 = vector.load %arg3[%c0_5, %c0_6, %c0_7] : memref<2x32x96xf32, #tpu.memory_space<vmem>>, vector<1x32x96xf32>
    %26 = vector.shape_cast %25 : vector<1x32x96xf32> to vector<32x96xf32>
    %27 = arith.truncf %26 : vector<32x96xf32> to vector<32x96xbf16>
    %c1 = arith.constant 1 : index
    %c0_8 = arith.constant 0 : index
    %c0_9 = arith.constant 0 : index
    %28 = vector.load %arg3[%c1, %c0_8, %c0_9] : memref<2x32x96xf32, #tpu.memory_space<vmem>>, vector<1x32x96xf32>
    %29 = vector.shape_cast %28 : vector<1x32x96xf32> to vector<32x96xf32>
    %30 = arith.truncf %29 : vector<32x96xf32> to vector<32x96xbf16>
    %c0_10 = arith.constant 0 : index
    %c0_11 = arith.constant 0 : index
    %c0_12 = arith.constant 0 : index
    %31 = vector.load %arg4[%c0_10, %c0_11, %c0_12] : memref<2x32x96xf32, #tpu.memory_space<vmem>>, vector<1x32x96xf32>
    %32 = vector.shape_cast %31 : vector<1x32x96xf32> to vector<32x96xf32>
    %33 = arith.truncf %32 : vector<32x96xf32> to vector<32x96xbf16>
    %c1_13 = arith.constant 1 : index
    %c0_14 = arith.constant 0 : index
    %c0_15 = arith.constant 0 : index
    %34 = vector.load %arg4[%c1_13, %c0_14, %c0_15] : memref<2x32x96xf32, #tpu.memory_space<vmem>>, vector<1x32x96xf32>
    %35 = vector.shape_cast %34 : vector<1x32x96xf32> to vector<32x96xf32>
    %36 = arith.truncf %35 : vector<32x96xf32> to vector<32x96xbf16>
    %c1_16 = arith.constant 1 : index
    %c0_17 = arith.constant 0 : index
    %c0_18 = arith.constant 0 : index
    %37 = vector.load %arg5[%c1_16, %c0_17, %c0_18] : memref<2x1x96xf32, #tpu.memory_space<vmem>>, vector<1x1x96xf32>
    %38 = vector.shape_cast %37 : vector<1x1x96xf32> to vector<1x96xf32>
    %39 = vector.shape_cast %38 : vector<1x96xf32> to vector<1x96xf32>
    %40 = vector.broadcast %39 : vector<1x96xf32> to vector<8x96xf32>
    %c0_19 = arith.constant 0 : index
    %c0_20 = arith.constant 0 : index
    %c0_21 = arith.constant 0 : index
    %41 = vector.load %arg6[%c0_19, %c0_20, %c0_21] : memref<2x1x96xf32, #tpu.memory_space<vmem>>, vector<1x1x96xf32>
    %42 = vector.shape_cast %41 : vector<1x1x96xf32> to vector<1x96xf32>
    %43 = vector.shape_cast %42 : vector<1x96xf32> to vector<1x96xf32>
    %44 = vector.broadcast %43 : vector<1x96xf32> to vector<8x96xf32>
    %c1_22 = arith.constant 1 : index
    %c0_23 = arith.constant 0 : index
    %c0_24 = arith.constant 0 : index
    %45 = vector.load %arg6[%c1_22, %c0_23, %c0_24] : memref<2x1x96xf32, #tpu.memory_space<vmem>>, vector<1x1x96xf32>
    %46 = vector.shape_cast %45 : vector<1x1x96xf32> to vector<1x96xf32>
    %47 = vector.shape_cast %46 : vector<1x96xf32> to vector<1x96xf32>
    %48 = vector.broadcast %47 : vector<1x96xf32> to vector<8x96xf32>
    %49 = arith.truncf %7 : vector<64x32xf32> to vector<64x32xbf16>
    %cst_25 = arith.constant dense<0.000000e+00> : vector<64x96xf32>
    %50 = tpu.matmul %49, %27, %cst_25 {dimension_numbers = #tpu.dot_dimension_numbers<[1], [0], [0], [1], [0, 0, 1, 1], [], []>} : vector<64x32xbf16>, vector<32x96xbf16>, vector<64x96xf32> -> vector<64x96xf32>
    %c0_26 = arith.constant 0 : index
    %c0_27 = arith.constant 0 : index
    %c0_28 = arith.constant 0 : index
    %51 = vector.load %arg5[%c0_26, %c0_27, %c0_28] : memref<2x1x96xf32, #tpu.memory_space<vmem>>, vector<1x1x96xf32>
    %52 = vector.shape_cast %51 : vector<1x1x96xf32> to vector<1x96xf32>
    %53 = vector.broadcast %52 : vector<1x96xf32> to vector<64x96xf32>
    %54 = arith.addf %50, %53 : vector<64x96xf32>
    %cst_29 = arith.constant 0.000000e+00 : f32
    %55 = vector.broadcast %cst_29 : f32 to vector<8x32xf32>
    %cst_30 = arith.constant 0.000000e+00 : f32
    %56 = vector.broadcast %cst_30 : f32 to vector<8x32xf32>
    %57 = vector.extract_strided_slice %54 {offsets = [0, 0], sizes = [8, 96], strides = [1, 1]} : vector<64x96xf32> to vector<8x96xf32>
    %58 = arith.truncf %55 : vector<8x32xf32> to vector<8x32xbf16>
    %cst_31 = arith.constant dense<0.000000e+00> : vector<8x96xf32>
    %59 = tpu.matmul %58, %33, %cst_31 {dimension_numbers = #tpu.dot_dimension_numbers<[1], [0], [0], [1], [0, 0, 1, 1], [], []>} : vector<8x32xbf16>, vector<32x96xbf16>, vector<8x96xf32> -> vector<8x96xf32>
    %60 = arith.addf %59, %44 : vector<8x96xf32>
    %61 = vector.extract_strided_slice %57 {offsets = [0, 0], sizes = [8, 64], strides = [1, 1]} : vector<8x96xf32> to vector<8x64xf32>
    %62 = vector.extract_strided_slice %60 {offsets = [0, 0], sizes = [8, 64], strides = [1, 1]} : vector<8x96xf32> to vector<8x64xf32>
    %63 = arith.addf %61, %62 : vector<8x64xf32>
    %64 = arith.negf %63 : vector<8x64xf32>
    %65 = math.exp %64 : vector<8x64xf32>
    %cst_32 = arith.constant 1.000000e+00 : f32
    %66 = vector.broadcast %cst_32 : f32 to vector<8x64xf32>
    %67 = arith.addf %66, %65 : vector<8x64xf32>
    %68 = arith.divf %66, %67 : vector<8x64xf32>
    %69 = vector.extract_strided_slice %68 {offsets = [0, 0], sizes = [8, 32], strides = [1, 1]} : vector<8x64xf32> to vector<8x32xf32>
    %70 = vector.extract_strided_slice %68 {offsets = [0, 32], sizes = [8, 32], strides = [1, 1]} : vector<8x64xf32> to vector<8x32xf32>
    %71 = vector.extract_strided_slice %57 {offsets = [0, 64], sizes = [8, 32], strides = [1, 1]} : vector<8x96xf32> to vector<8x32xf32>
    %72 = vector.extract_strided_slice %60 {offsets = [0, 64], sizes = [8, 32], strides = [1, 1]} : vector<8x96xf32> to vector<8x32xf32>
    %73 = arith.mulf %69, %72 : vector<8x32xf32>
    %74 = arith.addf %71, %73 : vector<8x32xf32>
    %75 = math.tanh %74 : vector<8x32xf32>
    %76 = arith.subf %55, %75 : vector<8x32xf32>
    %77 = arith.mulf %70, %76 : vector<8x32xf32>
    %78 = arith.addf %75, %77 : vector<8x32xf32>
    %79 = vector.shape_cast %10 : vector<8x1xi1> to vector<8x1xi1>
    %80 = vector.broadcast %79 : vector<8x1xi1> to vector<8x32xi1>
    %81 = arith.select %80, %78, %55 : vector<8x32xi1>, vector<8x32xf32>
    %82 = arith.truncf %81 : vector<8x32xf32> to vector<8x32xbf16>
    %cst_33 = arith.constant dense<0.000000e+00> : vector<8x96xf32>
    %83 = tpu.matmul %82, %30, %cst_33 {dimension_numbers = #tpu.dot_dimension_numbers<[1], [0], [0], [1], [0, 0, 1, 1], [], []>} : vector<8x32xbf16>, vector<32x96xbf16>, vector<8x96xf32> -> vector<8x96xf32>
    %84 = arith.addf %83, %40 : vector<8x96xf32>
    %85 = arith.truncf %56 : vector<8x32xf32> to vector<8x32xbf16>
    %cst_34 = arith.constant dense<0.000000e+00> : vector<8x96xf32>
    %86 = tpu.matmul %85, %36, %cst_34 {dimension_numbers = #tpu.dot_dimension_numbers<[1], [0], [0], [1], [0, 0, 1, 1], [], []>} : vector<8x32xbf16>, vector<32x96xbf16>, vector<8x96xf32> -> vector<8x96xf32>
    %87 = arith.addf %86, %48 : vector<8x96xf32>
    %88 = vector.extract_strided_slice %84 {offsets = [0, 0], sizes = [8, 64], strides = [1, 1]} : vector<8x96xf32> to vector<8x64xf32>
    %89 = vector.extract_strided_slice %87 {offsets = [0, 0], sizes = [8, 64], strides = [1, 1]} : vector<8x96xf32> to vector<8x64xf32>
    %90 = arith.addf %88, %89 : vector<8x64xf32>
    %91 = arith.negf %90 : vector<8x64xf32>
    %92 = math.exp %91 : vector<8x64xf32>
    %cst_35 = arith.constant 1.000000e+00 : f32
    %93 = vector.broadcast %cst_35 : f32 to vector<8x64xf32>
    %94 = arith.addf %93, %92 : vector<8x64xf32>
    %95 = arith.divf %93, %94 : vector<8x64xf32>
    %96 = vector.extract_strided_slice %95 {offsets = [0, 0], sizes = [8, 32], strides = [1, 1]} : vector<8x64xf32> to vector<8x32xf32>
    %97 = vector.extract_strided_slice %95 {offsets = [0, 32], sizes = [8, 32], strides = [1, 1]} : vector<8x64xf32> to vector<8x32xf32>
    %98 = vector.extract_strided_slice %84 {offsets = [0, 64], sizes = [8, 32], strides = [1, 1]} : vector<8x96xf32> to vector<8x32xf32>
    %99 = vector.extract_strided_slice %87 {offsets = [0, 64], sizes = [8, 32], strides = [1, 1]} : vector<8x96xf32> to vector<8x32xf32>
    %100 = arith.mulf %96, %99 : vector<8x32xf32>
    %101 = arith.addf %98, %100 : vector<8x32xf32>
    %102 = math.tanh %101 : vector<8x32xf32>
    %103 = arith.subf %56, %102 : vector<8x32xf32>
    %104 = arith.mulf %97, %103 : vector<8x32xf32>
    %105 = arith.addf %102, %104 : vector<8x32xf32>
    %106 = vector.shape_cast %10 : vector<8x1xi1> to vector<8x1xi1>
    %107 = vector.broadcast %106 : vector<8x1xi1> to vector<8x32xi1>
    %108 = arith.select %107, %105, %56 : vector<8x32xi1>, vector<8x32xf32>
    %109 = vector.extract_strided_slice %54 {offsets = [8, 0], sizes = [8, 96], strides = [1, 1]} : vector<64x96xf32> to vector<8x96xf32>
    %110 = arith.truncf %81 : vector<8x32xf32> to vector<8x32xbf16>
    %cst_36 = arith.constant dense<0.000000e+00> : vector<8x96xf32>
    %111 = tpu.matmul %110, %33, %cst_36 {dimension_numbers = #tpu.dot_dimension_numbers<[1], [0], [0], [1], [0, 0, 1, 1], [], []>} : vector<8x32xbf16>, vector<32x96xbf16>, vector<8x96xf32> -> vector<8x96xf32>
    %112 = arith.addf %111, %44 : vector<8x96xf32>
    %113 = vector.extract_strided_slice %109 {offsets = [0, 0], sizes = [8, 64], strides = [1, 1]} : vector<8x96xf32> to vector<8x64xf32>
    %114 = vector.extract_strided_slice %112 {offsets = [0, 0], sizes = [8, 64], strides = [1, 1]} : vector<8x96xf32> to vector<8x64xf32>
    %115 = arith.addf %113, %114 : vector<8x64xf32>
    %116 = arith.negf %115 : vector<8x64xf32>
    %117 = math.exp %116 : vector<8x64xf32>
    %cst_37 = arith.constant 1.000000e+00 : f32
    %118 = vector.broadcast %cst_37 : f32 to vector<8x64xf32>
    %119 = arith.addf %118, %117 : vector<8x64xf32>
    %120 = arith.divf %118, %119 : vector<8x64xf32>
    %121 = vector.extract_strided_slice %120 {offsets = [0, 0], sizes = [8, 32], strides = [1, 1]} : vector<8x64xf32> to vector<8x32xf32>
    %122 = vector.extract_strided_slice %120 {offsets = [0, 32], sizes = [8, 32], strides = [1, 1]} : vector<8x64xf32> to vector<8x32xf32>
    %123 = vector.extract_strided_slice %109 {offsets = [0, 64], sizes = [8, 32], strides = [1, 1]} : vector<8x96xf32> to vector<8x32xf32>
    %124 = vector.extract_strided_slice %112 {offsets = [0, 64], sizes = [8, 32], strides = [1, 1]} : vector<8x96xf32> to vector<8x32xf32>
    %125 = arith.mulf %121, %124 : vector<8x32xf32>
    %126 = arith.addf %123, %125 : vector<8x32xf32>
    %127 = math.tanh %126 : vector<8x32xf32>
    %128 = arith.subf %81, %127 : vector<8x32xf32>
    %129 = arith.mulf %122, %128 : vector<8x32xf32>
    %130 = arith.addf %127, %129 : vector<8x32xf32>
    %131 = vector.shape_cast %12 : vector<8x1xi1> to vector<8x1xi1>
    %132 = vector.broadcast %131 : vector<8x1xi1> to vector<8x32xi1>
    %133 = arith.select %132, %130, %81 : vector<8x32xi1>, vector<8x32xf32>
    %134 = arith.truncf %133 : vector<8x32xf32> to vector<8x32xbf16>
    %cst_38 = arith.constant dense<0.000000e+00> : vector<8x96xf32>
    %135 = tpu.matmul %134, %30, %cst_38 {dimension_numbers = #tpu.dot_dimension_numbers<[1], [0], [0], [1], [0, 0, 1, 1], [], []>} : vector<8x32xbf16>, vector<32x96xbf16>, vector<8x96xf32> -> vector<8x96xf32>
    %136 = arith.addf %135, %40 : vector<8x96xf32>
    %137 = arith.truncf %108 : vector<8x32xf32> to vector<8x32xbf16>
    %cst_39 = arith.constant dense<0.000000e+00> : vector<8x96xf32>
    %138 = tpu.matmul %137, %36, %cst_39 {dimension_numbers = #tpu.dot_dimension_numbers<[1], [0], [0], [1], [0, 0, 1, 1], [], []>} : vector<8x32xbf16>, vector<32x96xbf16>, vector<8x96xf32> -> vector<8x96xf32>
    %139 = arith.addf %138, %48 : vector<8x96xf32>
    %140 = vector.extract_strided_slice %136 {offsets = [0, 0], sizes = [8, 64], strides = [1, 1]} : vector<8x96xf32> to vector<8x64xf32>
    %141 = vector.extract_strided_slice %139 {offsets = [0, 0], sizes = [8, 64], strides = [1, 1]} : vector<8x96xf32> to vector<8x64xf32>
    %142 = arith.addf %140, %141 : vector<8x64xf32>
    %143 = arith.negf %142 : vector<8x64xf32>
    %144 = math.exp %143 : vector<8x64xf32>
    %cst_40 = arith.constant 1.000000e+00 : f32
    %145 = vector.broadcast %cst_40 : f32 to vector<8x64xf32>
    %146 = arith.addf %145, %144 : vector<8x64xf32>
    %147 = arith.divf %145, %146 : vector<8x64xf32>
    %148 = vector.extract_strided_slice %147 {offsets = [0, 0], sizes = [8, 32], strides = [1, 1]} : vector<8x64xf32> to vector<8x32xf32>
    %149 = vector.extract_strided_slice %147 {offsets = [0, 32], sizes = [8, 32], strides = [1, 1]} : vector<8x64xf32> to vector<8x32xf32>
    %150 = vector.extract_strided_slice %136 {offsets = [0, 64], sizes = [8, 32], strides = [1, 1]} : vector<8x96xf32> to vector<8x32xf32>
    %151 = vector.extract_strided_slice %139 {offsets = [0, 64], sizes = [8, 32], strides = [1, 1]} : vector<8x96xf32> to vector<8x32xf32>
    %152 = arith.mulf %148, %151 : vector<8x32xf32>
    %153 = arith.addf %150, %152 : vector<8x32xf32>
    %154 = math.tanh %153 : vector<8x32xf32>
    %155 = arith.subf %108, %154 : vector<8x32xf32>
    %156 = arith.mulf %149, %155 : vector<8x32xf32>
    %157 = arith.addf %154, %156 : vector<8x32xf32>
    %158 = vector.shape_cast %12 : vector<8x1xi1> to vector<8x1xi1>
    %159 = vector.broadcast %158 : vector<8x1xi1> to vector<8x32xi1>
    %160 = arith.select %159, %157, %108 : vector<8x32xi1>, vector<8x32xf32>
    %161 = vector.extract_strided_slice %54 {offsets = [16, 0], sizes = [8, 96], strides = [1, 1]} : vector<64x96xf32> to vector<8x96xf32>
    %162 = arith.truncf %133 : vector<8x32xf32> to vector<8x32xbf16>
    %cst_41 = arith.constant dense<0.000000e+00> : vector<8x96xf32>
    %163 = tpu.matmul %162, %33, %cst_41 {dimension_numbers = #tpu.dot_dimension_numbers<[1], [0], [0], [1], [0, 0, 1, 1], [], []>} : vector<8x32xbf16>, vector<32x96xbf16>, vector<8x96xf32> -> vector<8x96xf32>
    %164 = arith.addf %163, %44 : vector<8x96xf32>
    %165 = vector.extract_strided_slice %161 {offsets = [0, 0], sizes = [8, 64], strides = [1, 1]} : vector<8x96xf32> to vector<8x64xf32>
    %166 = vector.extract_strided_slice %164 {offsets = [0, 0], sizes = [8, 64], strides = [1, 1]} : vector<8x96xf32> to vector<8x64xf32>
    %167 = arith.addf %165, %166 : vector<8x64xf32>
    %168 = arith.negf %167 : vector<8x64xf32>
    %169 = math.exp %168 : vector<8x64xf32>
    %cst_42 = arith.constant 1.000000e+00 : f32
    %170 = vector.broadcast %cst_42 : f32 to vector<8x64xf32>
    %171 = arith.addf %170, %169 : vector<8x64xf32>
    %172 = arith.divf %170, %171 : vector<8x64xf32>
    %173 = vector.extract_strided_slice %172 {offsets = [0, 0], sizes = [8, 32], strides = [1, 1]} : vector<8x64xf32> to vector<8x32xf32>
    %174 = vector.extract_strided_slice %172 {offsets = [0, 32], sizes = [8, 32], strides = [1, 1]} : vector<8x64xf32> to vector<8x32xf32>
    %175 = vector.extract_strided_slice %161 {offsets = [0, 64], sizes = [8, 32], strides = [1, 1]} : vector<8x96xf32> to vector<8x32xf32>
    %176 = vector.extract_strided_slice %164 {offsets = [0, 64], sizes = [8, 32], strides = [1, 1]} : vector<8x96xf32> to vector<8x32xf32>
    %177 = arith.mulf %173, %176 : vector<8x32xf32>
    %178 = arith.addf %175, %177 : vector<8x32xf32>
    %179 = math.tanh %178 : vector<8x32xf32>
    %180 = arith.subf %133, %179 : vector<8x32xf32>
    %181 = arith.mulf %174, %180 : vector<8x32xf32>
    %182 = arith.addf %179, %181 : vector<8x32xf32>
    %183 = vector.shape_cast %14 : vector<8x1xi1> to vector<8x1xi1>
    %184 = vector.broadcast %183 : vector<8x1xi1> to vector<8x32xi1>
    %185 = arith.select %184, %182, %133 : vector<8x32xi1>, vector<8x32xf32>
    %186 = arith.truncf %185 : vector<8x32xf32> to vector<8x32xbf16>
    %cst_43 = arith.constant dense<0.000000e+00> : vector<8x96xf32>
    %187 = tpu.matmul %186, %30, %cst_43 {dimension_numbers = #tpu.dot_dimension_numbers<[1], [0], [0], [1], [0, 0, 1, 1], [], []>} : vector<8x32xbf16>, vector<32x96xbf16>, vector<8x96xf32> -> vector<8x96xf32>
    %188 = arith.addf %187, %40 : vector<8x96xf32>
    %189 = arith.truncf %160 : vector<8x32xf32> to vector<8x32xbf16>
    %cst_44 = arith.constant dense<0.000000e+00> : vector<8x96xf32>
    %190 = tpu.matmul %189, %36, %cst_44 {dimension_numbers = #tpu.dot_dimension_numbers<[1], [0], [0], [1], [0, 0, 1, 1], [], []>} : vector<8x32xbf16>, vector<32x96xbf16>, vector<8x96xf32> -> vector<8x96xf32>
    %191 = arith.addf %190, %48 : vector<8x96xf32>
    %192 = vector.extract_strided_slice %188 {offsets = [0, 0], sizes = [8, 64], strides = [1, 1]} : vector<8x96xf32> to vector<8x64xf32>
    %193 = vector.extract_strided_slice %191 {offsets = [0, 0], sizes = [8, 64], strides = [1, 1]} : vector<8x96xf32> to vector<8x64xf32>
    %194 = arith.addf %192, %193 : vector<8x64xf32>
    %195 = arith.negf %194 : vector<8x64xf32>
    %196 = math.exp %195 : vector<8x64xf32>
    %cst_45 = arith.constant 1.000000e+00 : f32
    %197 = vector.broadcast %cst_45 : f32 to vector<8x64xf32>
    %198 = arith.addf %197, %196 : vector<8x64xf32>
    %199 = arith.divf %197, %198 : vector<8x64xf32>
    %200 = vector.extract_strided_slice %199 {offsets = [0, 0], sizes = [8, 32], strides = [1, 1]} : vector<8x64xf32> to vector<8x32xf32>
    %201 = vector.extract_strided_slice %199 {offsets = [0, 32], sizes = [8, 32], strides = [1, 1]} : vector<8x64xf32> to vector<8x32xf32>
    %202 = vector.extract_strided_slice %188 {offsets = [0, 64], sizes = [8, 32], strides = [1, 1]} : vector<8x96xf32> to vector<8x32xf32>
    %203 = vector.extract_strided_slice %191 {offsets = [0, 64], sizes = [8, 32], strides = [1, 1]} : vector<8x96xf32> to vector<8x32xf32>
    %204 = arith.mulf %200, %203 : vector<8x32xf32>
    %205 = arith.addf %202, %204 : vector<8x32xf32>
    %206 = math.tanh %205 : vector<8x32xf32>
    %207 = arith.subf %160, %206 : vector<8x32xf32>
    %208 = arith.mulf %201, %207 : vector<8x32xf32>
    %209 = arith.addf %206, %208 : vector<8x32xf32>
    %210 = vector.shape_cast %14 : vector<8x1xi1> to vector<8x1xi1>
    %211 = vector.broadcast %210 : vector<8x1xi1> to vector<8x32xi1>
    %212 = arith.select %211, %209, %160 : vector<8x32xi1>, vector<8x32xf32>
    %213 = vector.extract_strided_slice %54 {offsets = [24, 0], sizes = [8, 96], strides = [1, 1]} : vector<64x96xf32> to vector<8x96xf32>
    %214 = arith.truncf %185 : vector<8x32xf32> to vector<8x32xbf16>
    %cst_46 = arith.constant dense<0.000000e+00> : vector<8x96xf32>
    %215 = tpu.matmul %214, %33, %cst_46 {dimension_numbers = #tpu.dot_dimension_numbers<[1], [0], [0], [1], [0, 0, 1, 1], [], []>} : vector<8x32xbf16>, vector<32x96xbf16>, vector<8x96xf32> -> vector<8x96xf32>
    %216 = arith.addf %215, %44 : vector<8x96xf32>
    %217 = vector.extract_strided_slice %213 {offsets = [0, 0], sizes = [8, 64], strides = [1, 1]} : vector<8x96xf32> to vector<8x64xf32>
    %218 = vector.extract_strided_slice %216 {offsets = [0, 0], sizes = [8, 64], strides = [1, 1]} : vector<8x96xf32> to vector<8x64xf32>
    %219 = arith.addf %217, %218 : vector<8x64xf32>
    %220 = arith.negf %219 : vector<8x64xf32>
    %221 = math.exp %220 : vector<8x64xf32>
    %cst_47 = arith.constant 1.000000e+00 : f32
    %222 = vector.broadcast %cst_47 : f32 to vector<8x64xf32>
    %223 = arith.addf %222, %221 : vector<8x64xf32>
    %224 = arith.divf %222, %223 : vector<8x64xf32>
    %225 = vector.extract_strided_slice %224 {offsets = [0, 0], sizes = [8, 32], strides = [1, 1]} : vector<8x64xf32> to vector<8x32xf32>
    %226 = vector.extract_strided_slice %224 {offsets = [0, 32], sizes = [8, 32], strides = [1, 1]} : vector<8x64xf32> to vector<8x32xf32>
    %227 = vector.extract_strided_slice %213 {offsets = [0, 64], sizes = [8, 32], strides = [1, 1]} : vector<8x96xf32> to vector<8x32xf32>
    %228 = vector.extract_strided_slice %216 {offsets = [0, 64], sizes = [8, 32], strides = [1, 1]} : vector<8x96xf32> to vector<8x32xf32>
    %229 = arith.mulf %225, %228 : vector<8x32xf32>
    %230 = arith.addf %227, %229 : vector<8x32xf32>
    %231 = math.tanh %230 : vector<8x32xf32>
    %232 = arith.subf %185, %231 : vector<8x32xf32>
    %233 = arith.mulf %226, %232 : vector<8x32xf32>
    %234 = arith.addf %231, %233 : vector<8x32xf32>
    %235 = vector.shape_cast %16 : vector<8x1xi1> to vector<8x1xi1>
    %236 = vector.broadcast %235 : vector<8x1xi1> to vector<8x32xi1>
    %237 = arith.select %236, %234, %185 : vector<8x32xi1>, vector<8x32xf32>
    %238 = arith.truncf %237 : vector<8x32xf32> to vector<8x32xbf16>
    %cst_48 = arith.constant dense<0.000000e+00> : vector<8x96xf32>
    %239 = tpu.matmul %238, %30, %cst_48 {dimension_numbers = #tpu.dot_dimension_numbers<[1], [0], [0], [1], [0, 0, 1, 1], [], []>} : vector<8x32xbf16>, vector<32x96xbf16>, vector<8x96xf32> -> vector<8x96xf32>
    %240 = arith.addf %239, %40 : vector<8x96xf32>
    %241 = arith.truncf %212 : vector<8x32xf32> to vector<8x32xbf16>
    %cst_49 = arith.constant dense<0.000000e+00> : vector<8x96xf32>
    %242 = tpu.matmul %241, %36, %cst_49 {dimension_numbers = #tpu.dot_dimension_numbers<[1], [0], [0], [1], [0, 0, 1, 1], [], []>} : vector<8x32xbf16>, vector<32x96xbf16>, vector<8x96xf32> -> vector<8x96xf32>
    %243 = arith.addf %242, %48 : vector<8x96xf32>
    %244 = vector.extract_strided_slice %240 {offsets = [0, 0], sizes = [8, 64], strides = [1, 1]} : vector<8x96xf32> to vector<8x64xf32>
    %245 = vector.extract_strided_slice %243 {offsets = [0, 0], sizes = [8, 64], strides = [1, 1]} : vector<8x96xf32> to vector<8x64xf32>
    %246 = arith.addf %244, %245 : vector<8x64xf32>
    %247 = arith.negf %246 : vector<8x64xf32>
    %248 = math.exp %247 : vector<8x64xf32>
    %cst_50 = arith.constant 1.000000e+00 : f32
    %249 = vector.broadcast %cst_50 : f32 to vector<8x64xf32>
    %250 = arith.addf %249, %248 : vector<8x64xf32>
    %251 = arith.divf %249, %250 : vector<8x64xf32>
    %252 = vector.extract_strided_slice %251 {offsets = [0, 0], sizes = [8, 32], strides = [1, 1]} : vector<8x64xf32> to vector<8x32xf32>
    %253 = vector.extract_strided_slice %251 {offsets = [0, 32], sizes = [8, 32], strides = [1, 1]} : vector<8x64xf32> to vector<8x32xf32>
    %254 = vector.extract_strided_slice %240 {offsets = [0, 64], sizes = [8, 32], strides = [1, 1]} : vector<8x96xf32> to vector<8x32xf32>
    %255 = vector.extract_strided_slice %243 {offsets = [0, 64], sizes = [8, 32], strides = [1, 1]} : vector<8x96xf32> to vector<8x32xf32>
    %256 = arith.mulf %252, %255 : vector<8x32xf32>
    %257 = arith.addf %254, %256 : vector<8x32xf32>
    %258 = math.tanh %257 : vector<8x32xf32>
    %259 = arith.subf %212, %258 : vector<8x32xf32>
    %260 = arith.mulf %253, %259 : vector<8x32xf32>
    %261 = arith.addf %258, %260 : vector<8x32xf32>
    %262 = vector.shape_cast %16 : vector<8x1xi1> to vector<8x1xi1>
    %263 = vector.broadcast %262 : vector<8x1xi1> to vector<8x32xi1>
    %264 = arith.select %263, %261, %212 : vector<8x32xi1>, vector<8x32xf32>
    %265 = vector.extract_strided_slice %54 {offsets = [32, 0], sizes = [8, 96], strides = [1, 1]} : vector<64x96xf32> to vector<8x96xf32>
    %266 = arith.truncf %237 : vector<8x32xf32> to vector<8x32xbf16>
    %cst_51 = arith.constant dense<0.000000e+00> : vector<8x96xf32>
    %267 = tpu.matmul %266, %33, %cst_51 {dimension_numbers = #tpu.dot_dimension_numbers<[1], [0], [0], [1], [0, 0, 1, 1], [], []>} : vector<8x32xbf16>, vector<32x96xbf16>, vector<8x96xf32> -> vector<8x96xf32>
    %268 = arith.addf %267, %44 : vector<8x96xf32>
    %269 = vector.extract_strided_slice %265 {offsets = [0, 0], sizes = [8, 64], strides = [1, 1]} : vector<8x96xf32> to vector<8x64xf32>
    %270 = vector.extract_strided_slice %268 {offsets = [0, 0], sizes = [8, 64], strides = [1, 1]} : vector<8x96xf32> to vector<8x64xf32>
    %271 = arith.addf %269, %270 : vector<8x64xf32>
    %272 = arith.negf %271 : vector<8x64xf32>
    %273 = math.exp %272 : vector<8x64xf32>
    %cst_52 = arith.constant 1.000000e+00 : f32
    %274 = vector.broadcast %cst_52 : f32 to vector<8x64xf32>
    %275 = arith.addf %274, %273 : vector<8x64xf32>
    %276 = arith.divf %274, %275 : vector<8x64xf32>
    %277 = vector.extract_strided_slice %276 {offsets = [0, 0], sizes = [8, 32], strides = [1, 1]} : vector<8x64xf32> to vector<8x32xf32>
    %278 = vector.extract_strided_slice %276 {offsets = [0, 32], sizes = [8, 32], strides = [1, 1]} : vector<8x64xf32> to vector<8x32xf32>
    %279 = vector.extract_strided_slice %265 {offsets = [0, 64], sizes = [8, 32], strides = [1, 1]} : vector<8x96xf32> to vector<8x32xf32>
    %280 = vector.extract_strided_slice %268 {offsets = [0, 64], sizes = [8, 32], strides = [1, 1]} : vector<8x96xf32> to vector<8x32xf32>
    %281 = arith.mulf %277, %280 : vector<8x32xf32>
    %282 = arith.addf %279, %281 : vector<8x32xf32>
    %283 = math.tanh %282 : vector<8x32xf32>
    %284 = arith.subf %237, %283 : vector<8x32xf32>
    %285 = arith.mulf %278, %284 : vector<8x32xf32>
    %286 = arith.addf %283, %285 : vector<8x32xf32>
    %287 = vector.shape_cast %18 : vector<8x1xi1> to vector<8x1xi1>
    %288 = vector.broadcast %287 : vector<8x1xi1> to vector<8x32xi1>
    %289 = arith.select %288, %286, %237 : vector<8x32xi1>, vector<8x32xf32>
    %290 = arith.truncf %289 : vector<8x32xf32> to vector<8x32xbf16>
    %cst_53 = arith.constant dense<0.000000e+00> : vector<8x96xf32>
    %291 = tpu.matmul %290, %30, %cst_53 {dimension_numbers = #tpu.dot_dimension_numbers<[1], [0], [0], [1], [0, 0, 1, 1], [], []>} : vector<8x32xbf16>, vector<32x96xbf16>, vector<8x96xf32> -> vector<8x96xf32>
    %292 = arith.addf %291, %40 : vector<8x96xf32>
    %293 = arith.truncf %264 : vector<8x32xf32> to vector<8x32xbf16>
    %cst_54 = arith.constant dense<0.000000e+00> : vector<8x96xf32>
    %294 = tpu.matmul %293, %36, %cst_54 {dimension_numbers = #tpu.dot_dimension_numbers<[1], [0], [0], [1], [0, 0, 1, 1], [], []>} : vector<8x32xbf16>, vector<32x96xbf16>, vector<8x96xf32> -> vector<8x96xf32>
    %295 = arith.addf %294, %48 : vector<8x96xf32>
    %296 = vector.extract_strided_slice %292 {offsets = [0, 0], sizes = [8, 64], strides = [1, 1]} : vector<8x96xf32> to vector<8x64xf32>
    %297 = vector.extract_strided_slice %295 {offsets = [0, 0], sizes = [8, 64], strides = [1, 1]} : vector<8x96xf32> to vector<8x64xf32>
    %298 = arith.addf %296, %297 : vector<8x64xf32>
    %299 = arith.negf %298 : vector<8x64xf32>
    %300 = math.exp %299 : vector<8x64xf32>
    %cst_55 = arith.constant 1.000000e+00 : f32
    %301 = vector.broadcast %cst_55 : f32 to vector<8x64xf32>
    %302 = arith.addf %301, %300 : vector<8x64xf32>
    %303 = arith.divf %301, %302 : vector<8x64xf32>
    %304 = vector.extract_strided_slice %303 {offsets = [0, 0], sizes = [8, 32], strides = [1, 1]} : vector<8x64xf32> to vector<8x32xf32>
    %305 = vector.extract_strided_slice %303 {offsets = [0, 32], sizes = [8, 32], strides = [1, 1]} : vector<8x64xf32> to vector<8x32xf32>
    %306 = vector.extract_strided_slice %292 {offsets = [0, 64], sizes = [8, 32], strides = [1, 1]} : vector<8x96xf32> to vector<8x32xf32>
    %307 = vector.extract_strided_slice %295 {offsets = [0, 64], sizes = [8, 32], strides = [1, 1]} : vector<8x96xf32> to vector<8x32xf32>
    %308 = arith.mulf %304, %307 : vector<8x32xf32>
    %309 = arith.addf %306, %308 : vector<8x32xf32>
    %310 = math.tanh %309 : vector<8x32xf32>
    %311 = arith.subf %264, %310 : vector<8x32xf32>
    %312 = arith.mulf %305, %311 : vector<8x32xf32>
    %313 = arith.addf %310, %312 : vector<8x32xf32>
    %314 = vector.shape_cast %18 : vector<8x1xi1> to vector<8x1xi1>
    %315 = vector.broadcast %314 : vector<8x1xi1> to vector<8x32xi1>
    %316 = arith.select %315, %313, %264 : vector<8x32xi1>, vector<8x32xf32>
    %317 = vector.extract_strided_slice %54 {offsets = [40, 0], sizes = [8, 96], strides = [1, 1]} : vector<64x96xf32> to vector<8x96xf32>
    %318 = arith.truncf %289 : vector<8x32xf32> to vector<8x32xbf16>
    %cst_56 = arith.constant dense<0.000000e+00> : vector<8x96xf32>
    %319 = tpu.matmul %318, %33, %cst_56 {dimension_numbers = #tpu.dot_dimension_numbers<[1], [0], [0], [1], [0, 0, 1, 1], [], []>} : vector<8x32xbf16>, vector<32x96xbf16>, vector<8x96xf32> -> vector<8x96xf32>
    %320 = arith.addf %319, %44 : vector<8x96xf32>
    %321 = vector.extract_strided_slice %317 {offsets = [0, 0], sizes = [8, 64], strides = [1, 1]} : vector<8x96xf32> to vector<8x64xf32>
    %322 = vector.extract_strided_slice %320 {offsets = [0, 0], sizes = [8, 64], strides = [1, 1]} : vector<8x96xf32> to vector<8x64xf32>
    %323 = arith.addf %321, %322 : vector<8x64xf32>
    %324 = arith.negf %323 : vector<8x64xf32>
    %325 = math.exp %324 : vector<8x64xf32>
    %cst_57 = arith.constant 1.000000e+00 : f32
    %326 = vector.broadcast %cst_57 : f32 to vector<8x64xf32>
    %327 = arith.addf %326, %325 : vector<8x64xf32>
    %328 = arith.divf %326, %327 : vector<8x64xf32>
    %329 = vector.extract_strided_slice %328 {offsets = [0, 0], sizes = [8, 32], strides = [1, 1]} : vector<8x64xf32> to vector<8x32xf32>
    %330 = vector.extract_strided_slice %328 {offsets = [0, 32], sizes = [8, 32], strides = [1, 1]} : vector<8x64xf32> to vector<8x32xf32>
    %331 = vector.extract_strided_slice %317 {offsets = [0, 64], sizes = [8, 32], strides = [1, 1]} : vector<8x96xf32> to vector<8x32xf32>
    %332 = vector.extract_strided_slice %320 {offsets = [0, 64], sizes = [8, 32], strides = [1, 1]} : vector<8x96xf32> to vector<8x32xf32>
    %333 = arith.mulf %329, %332 : vector<8x32xf32>
    %334 = arith.addf %331, %333 : vector<8x32xf32>
    %335 = math.tanh %334 : vector<8x32xf32>
    %336 = arith.subf %289, %335 : vector<8x32xf32>
    %337 = arith.mulf %330, %336 : vector<8x32xf32>
    %338 = arith.addf %335, %337 : vector<8x32xf32>
    %339 = vector.shape_cast %20 : vector<8x1xi1> to vector<8x1xi1>
    %340 = vector.broadcast %339 : vector<8x1xi1> to vector<8x32xi1>
    %341 = arith.select %340, %338, %289 : vector<8x32xi1>, vector<8x32xf32>
    %342 = arith.truncf %341 : vector<8x32xf32> to vector<8x32xbf16>
    %cst_58 = arith.constant dense<0.000000e+00> : vector<8x96xf32>
    %343 = tpu.matmul %342, %30, %cst_58 {dimension_numbers = #tpu.dot_dimension_numbers<[1], [0], [0], [1], [0, 0, 1, 1], [], []>} : vector<8x32xbf16>, vector<32x96xbf16>, vector<8x96xf32> -> vector<8x96xf32>
    %344 = arith.addf %343, %40 : vector<8x96xf32>
    %345 = arith.truncf %316 : vector<8x32xf32> to vector<8x32xbf16>
    %cst_59 = arith.constant dense<0.000000e+00> : vector<8x96xf32>
    %346 = tpu.matmul %345, %36, %cst_59 {dimension_numbers = #tpu.dot_dimension_numbers<[1], [0], [0], [1], [0, 0, 1, 1], [], []>} : vector<8x32xbf16>, vector<32x96xbf16>, vector<8x96xf32> -> vector<8x96xf32>
    %347 = arith.addf %346, %48 : vector<8x96xf32>
    %348 = vector.extract_strided_slice %344 {offsets = [0, 0], sizes = [8, 64], strides = [1, 1]} : vector<8x96xf32> to vector<8x64xf32>
    %349 = vector.extract_strided_slice %347 {offsets = [0, 0], sizes = [8, 64], strides = [1, 1]} : vector<8x96xf32> to vector<8x64xf32>
    %350 = arith.addf %348, %349 : vector<8x64xf32>
    %351 = arith.negf %350 : vector<8x64xf32>
    %352 = math.exp %351 : vector<8x64xf32>
    %cst_60 = arith.constant 1.000000e+00 : f32
    %353 = vector.broadcast %cst_60 : f32 to vector<8x64xf32>
    %354 = arith.addf %353, %352 : vector<8x64xf32>
    %355 = arith.divf %353, %354 : vector<8x64xf32>
    %356 = vector.extract_strided_slice %355 {offsets = [0, 0], sizes = [8, 32], strides = [1, 1]} : vector<8x64xf32> to vector<8x32xf32>
    %357 = vector.extract_strided_slice %355 {offsets = [0, 32], sizes = [8, 32], strides = [1, 1]} : vector<8x64xf32> to vector<8x32xf32>
    %358 = vector.extract_strided_slice %344 {offsets = [0, 64], sizes = [8, 32], strides = [1, 1]} : vector<8x96xf32> to vector<8x32xf32>
    %359 = vector.extract_strided_slice %347 {offsets = [0, 64], sizes = [8, 32], strides = [1, 1]} : vector<8x96xf32> to vector<8x32xf32>
    %360 = arith.mulf %356, %359 : vector<8x32xf32>
    %361 = arith.addf %358, %360 : vector<8x32xf32>
    %362 = math.tanh %361 : vector<8x32xf32>
    %363 = arith.subf %316, %362 : vector<8x32xf32>
    %364 = arith.mulf %357, %363 : vector<8x32xf32>
    %365 = arith.addf %362, %364 : vector<8x32xf32>
    %366 = vector.shape_cast %20 : vector<8x1xi1> to vector<8x1xi1>
    %367 = vector.broadcast %366 : vector<8x1xi1> to vector<8x32xi1>
    %368 = arith.select %367, %365, %316 : vector<8x32xi1>, vector<8x32xf32>
    %369 = vector.extract_strided_slice %54 {offsets = [48, 0], sizes = [8, 96], strides = [1, 1]} : vector<64x96xf32> to vector<8x96xf32>
    %370 = arith.truncf %341 : vector<8x32xf32> to vector<8x32xbf16>
    %cst_61 = arith.constant dense<0.000000e+00> : vector<8x96xf32>
    %371 = tpu.matmul %370, %33, %cst_61 {dimension_numbers = #tpu.dot_dimension_numbers<[1], [0], [0], [1], [0, 0, 1, 1], [], []>} : vector<8x32xbf16>, vector<32x96xbf16>, vector<8x96xf32> -> vector<8x96xf32>
    %372 = arith.addf %371, %44 : vector<8x96xf32>
    %373 = vector.extract_strided_slice %369 {offsets = [0, 0], sizes = [8, 64], strides = [1, 1]} : vector<8x96xf32> to vector<8x64xf32>
    %374 = vector.extract_strided_slice %372 {offsets = [0, 0], sizes = [8, 64], strides = [1, 1]} : vector<8x96xf32> to vector<8x64xf32>
    %375 = arith.addf %373, %374 : vector<8x64xf32>
    %376 = arith.negf %375 : vector<8x64xf32>
    %377 = math.exp %376 : vector<8x64xf32>
    %cst_62 = arith.constant 1.000000e+00 : f32
    %378 = vector.broadcast %cst_62 : f32 to vector<8x64xf32>
    %379 = arith.addf %378, %377 : vector<8x64xf32>
    %380 = arith.divf %378, %379 : vector<8x64xf32>
    %381 = vector.extract_strided_slice %380 {offsets = [0, 0], sizes = [8, 32], strides = [1, 1]} : vector<8x64xf32> to vector<8x32xf32>
    %382 = vector.extract_strided_slice %380 {offsets = [0, 32], sizes = [8, 32], strides = [1, 1]} : vector<8x64xf32> to vector<8x32xf32>
    %383 = vector.extract_strided_slice %369 {offsets = [0, 64], sizes = [8, 32], strides = [1, 1]} : vector<8x96xf32> to vector<8x32xf32>
    %384 = vector.extract_strided_slice %372 {offsets = [0, 64], sizes = [8, 32], strides = [1, 1]} : vector<8x96xf32> to vector<8x32xf32>
    %385 = arith.mulf %381, %384 : vector<8x32xf32>
    %386 = arith.addf %383, %385 : vector<8x32xf32>
    %387 = math.tanh %386 : vector<8x32xf32>
    %388 = arith.subf %341, %387 : vector<8x32xf32>
    %389 = arith.mulf %382, %388 : vector<8x32xf32>
    %390 = arith.addf %387, %389 : vector<8x32xf32>
    %391 = vector.shape_cast %22 : vector<8x1xi1> to vector<8x1xi1>
    %392 = vector.broadcast %391 : vector<8x1xi1> to vector<8x32xi1>
    %393 = arith.select %392, %390, %341 : vector<8x32xi1>, vector<8x32xf32>
    %394 = arith.truncf %393 : vector<8x32xf32> to vector<8x32xbf16>
    %cst_63 = arith.constant dense<0.000000e+00> : vector<8x96xf32>
    %395 = tpu.matmul %394, %30, %cst_63 {dimension_numbers = #tpu.dot_dimension_numbers<[1], [0], [0], [1], [0, 0, 1, 1], [], []>} : vector<8x32xbf16>, vector<32x96xbf16>, vector<8x96xf32> -> vector<8x96xf32>
    %396 = arith.addf %395, %40 : vector<8x96xf32>
    %397 = arith.truncf %368 : vector<8x32xf32> to vector<8x32xbf16>
    %cst_64 = arith.constant dense<0.000000e+00> : vector<8x96xf32>
    %398 = tpu.matmul %397, %36, %cst_64 {dimension_numbers = #tpu.dot_dimension_numbers<[1], [0], [0], [1], [0, 0, 1, 1], [], []>} : vector<8x32xbf16>, vector<32x96xbf16>, vector<8x96xf32> -> vector<8x96xf32>
    %399 = arith.addf %398, %48 : vector<8x96xf32>
    %400 = vector.extract_strided_slice %396 {offsets = [0, 0], sizes = [8, 64], strides = [1, 1]} : vector<8x96xf32> to vector<8x64xf32>
    %401 = vector.extract_strided_slice %399 {offsets = [0, 0], sizes = [8, 64], strides = [1, 1]} : vector<8x96xf32> to vector<8x64xf32>
    %402 = arith.addf %400, %401 : vector<8x64xf32>
    %403 = arith.negf %402 : vector<8x64xf32>
    %404 = math.exp %403 : vector<8x64xf32>
    %cst_65 = arith.constant 1.000000e+00 : f32
    %405 = vector.broadcast %cst_65 : f32 to vector<8x64xf32>
    %406 = arith.addf %405, %404 : vector<8x64xf32>
    %407 = arith.divf %405, %406 : vector<8x64xf32>
    %408 = vector.extract_strided_slice %407 {offsets = [0, 0], sizes = [8, 32], strides = [1, 1]} : vector<8x64xf32> to vector<8x32xf32>
    %409 = vector.extract_strided_slice %407 {offsets = [0, 32], sizes = [8, 32], strides = [1, 1]} : vector<8x64xf32> to vector<8x32xf32>
    %410 = vector.extract_strided_slice %396 {offsets = [0, 64], sizes = [8, 32], strides = [1, 1]} : vector<8x96xf32> to vector<8x32xf32>
    %411 = vector.extract_strided_slice %399 {offsets = [0, 64], sizes = [8, 32], strides = [1, 1]} : vector<8x96xf32> to vector<8x32xf32>
    %412 = arith.mulf %408, %411 : vector<8x32xf32>
    %413 = arith.addf %410, %412 : vector<8x32xf32>
    %414 = math.tanh %413 : vector<8x32xf32>
    %415 = arith.subf %368, %414 : vector<8x32xf32>
    %416 = arith.mulf %409, %415 : vector<8x32xf32>
    %417 = arith.addf %414, %416 : vector<8x32xf32>
    %418 = vector.shape_cast %22 : vector<8x1xi1> to vector<8x1xi1>
    %419 = vector.broadcast %418 : vector<8x1xi1> to vector<8x32xi1>
    %420 = arith.select %419, %417, %368 : vector<8x32xi1>, vector<8x32xf32>
    %421 = vector.extract_strided_slice %54 {offsets = [56, 0], sizes = [8, 96], strides = [1, 1]} : vector<64x96xf32> to vector<8x96xf32>
    %422 = arith.truncf %393 : vector<8x32xf32> to vector<8x32xbf16>
    %cst_66 = arith.constant dense<0.000000e+00> : vector<8x96xf32>
    %423 = tpu.matmul %422, %33, %cst_66 {dimension_numbers = #tpu.dot_dimension_numbers<[1], [0], [0], [1], [0, 0, 1, 1], [], []>} : vector<8x32xbf16>, vector<32x96xbf16>, vector<8x96xf32> -> vector<8x96xf32>
    %424 = arith.addf %423, %44 : vector<8x96xf32>
    %425 = vector.extract_strided_slice %421 {offsets = [0, 0], sizes = [8, 64], strides = [1, 1]} : vector<8x96xf32> to vector<8x64xf32>
    %426 = vector.extract_strided_slice %424 {offsets = [0, 0], sizes = [8, 64], strides = [1, 1]} : vector<8x96xf32> to vector<8x64xf32>
    %427 = arith.addf %425, %426 : vector<8x64xf32>
    %428 = arith.negf %427 : vector<8x64xf32>
    %429 = math.exp %428 : vector<8x64xf32>
    %cst_67 = arith.constant 1.000000e+00 : f32
    %430 = vector.broadcast %cst_67 : f32 to vector<8x64xf32>
    %431 = arith.addf %430, %429 : vector<8x64xf32>
    %432 = arith.divf %430, %431 : vector<8x64xf32>
    %433 = vector.extract_strided_slice %432 {offsets = [0, 0], sizes = [8, 32], strides = [1, 1]} : vector<8x64xf32> to vector<8x32xf32>
    %434 = vector.extract_strided_slice %432 {offsets = [0, 32], sizes = [8, 32], strides = [1, 1]} : vector<8x64xf32> to vector<8x32xf32>
    %435 = vector.extract_strided_slice %421 {offsets = [0, 64], sizes = [8, 32], strides = [1, 1]} : vector<8x96xf32> to vector<8x32xf32>
    %436 = vector.extract_strided_slice %424 {offsets = [0, 64], sizes = [8, 32], strides = [1, 1]} : vector<8x96xf32> to vector<8x32xf32>
    %437 = arith.mulf %433, %436 : vector<8x32xf32>
    %438 = arith.addf %435, %437 : vector<8x32xf32>
    %439 = math.tanh %438 : vector<8x32xf32>
    %440 = arith.subf %393, %439 : vector<8x32xf32>
    %441 = arith.mulf %434, %440 : vector<8x32xf32>
    %442 = arith.addf %439, %441 : vector<8x32xf32>
    %443 = vector.shape_cast %24 : vector<8x1xi1> to vector<8x1xi1>
    %444 = vector.broadcast %443 : vector<8x1xi1> to vector<8x32xi1>
    %445 = arith.select %444, %442, %393 : vector<8x32xi1>, vector<8x32xf32>
    %446 = arith.truncf %445 : vector<8x32xf32> to vector<8x32xbf16>
    %cst_68 = arith.constant dense<0.000000e+00> : vector<8x96xf32>
    %447 = tpu.matmul %446, %30, %cst_68 {dimension_numbers = #tpu.dot_dimension_numbers<[1], [0], [0], [1], [0, 0, 1, 1], [], []>} : vector<8x32xbf16>, vector<32x96xbf16>, vector<8x96xf32> -> vector<8x96xf32>
    %448 = arith.addf %447, %40 : vector<8x96xf32>
    %449 = arith.truncf %420 : vector<8x32xf32> to vector<8x32xbf16>
    %cst_69 = arith.constant dense<0.000000e+00> : vector<8x96xf32>
    %450 = tpu.matmul %449, %36, %cst_69 {dimension_numbers = #tpu.dot_dimension_numbers<[1], [0], [0], [1], [0, 0, 1, 1], [], []>} : vector<8x32xbf16>, vector<32x96xbf16>, vector<8x96xf32> -> vector<8x96xf32>
    %451 = arith.addf %450, %48 : vector<8x96xf32>
    %452 = vector.extract_strided_slice %448 {offsets = [0, 0], sizes = [8, 64], strides = [1, 1]} : vector<8x96xf32> to vector<8x64xf32>
    %453 = vector.extract_strided_slice %451 {offsets = [0, 0], sizes = [8, 64], strides = [1, 1]} : vector<8x96xf32> to vector<8x64xf32>
    %454 = arith.addf %452, %453 : vector<8x64xf32>
    %455 = arith.negf %454 : vector<8x64xf32>
    %456 = math.exp %455 : vector<8x64xf32>
    %cst_70 = arith.constant 1.000000e+00 : f32
    %457 = vector.broadcast %cst_70 : f32 to vector<8x64xf32>
    %458 = arith.addf %457, %456 : vector<8x64xf32>
    %459 = arith.divf %457, %458 : vector<8x64xf32>
    %460 = vector.extract_strided_slice %459 {offsets = [0, 0], sizes = [8, 32], strides = [1, 1]} : vector<8x64xf32> to vector<8x32xf32>
    %461 = vector.extract_strided_slice %459 {offsets = [0, 32], sizes = [8, 32], strides = [1, 1]} : vector<8x64xf32> to vector<8x32xf32>
    %462 = vector.extract_strided_slice %448 {offsets = [0, 64], sizes = [8, 32], strides = [1, 1]} : vector<8x96xf32> to vector<8x32xf32>
    %463 = vector.extract_strided_slice %451 {offsets = [0, 64], sizes = [8, 32], strides = [1, 1]} : vector<8x96xf32> to vector<8x32xf32>
    %464 = arith.mulf %460, %463 : vector<8x32xf32>
    %465 = arith.addf %462, %464 : vector<8x32xf32>
    %466 = math.tanh %465 : vector<8x32xf32>
    %467 = arith.subf %420, %466 : vector<8x32xf32>
    %468 = arith.mulf %461, %467 : vector<8x32xf32>
    %469 = arith.addf %466, %468 : vector<8x32xf32>
    %470 = vector.shape_cast %24 : vector<8x1xi1> to vector<8x1xi1>
    %471 = vector.broadcast %470 : vector<8x1xi1> to vector<8x32xi1>
    %472 = arith.select %471, %469, %420 : vector<8x32xi1>, vector<8x32xf32>
    %c0_71 = arith.constant 0 : index
    %c0_72 = arith.constant 0 : index
    %473 = vector.load %arg7[%c0_71, %c0_72] : memref<32x4xf32, #tpu.memory_space<vmem>>, vector<32x4xf32>
    %cst_73 = arith.constant dense<0.000000e+00> : vector<8x4xf32>
    %474 = tpu.matmul %472, %473, %cst_73 {dimension_numbers = #tpu.dot_dimension_numbers<[1], [0], [0], [1], [0, 0, 1, 1], [], []>} : vector<8x32xf32>, vector<32x4xf32>, vector<8x4xf32> -> vector<8x4xf32>
    %c0_74 = arith.constant 0 : index
    %c0_75 = arith.constant 0 : index
    %475 = vector.load %arg8[%c0_74, %c0_75] : memref<1x4xf32, #tpu.memory_space<vmem>>, vector<1x4xf32>
    %476 = vector.broadcast %475 : vector<1x4xf32> to vector<8x4xf32>
    %477 = arith.addf %474, %476 : vector<8x4xf32>
    %c0_76 = arith.constant 0 : index
    %c0_77 = arith.constant 0 : index
    %478 = vector.load %arg9[%c0_76, %c0_77] : memref<8x4xf32, #tpu.memory_space<vmem>>, vector<8x4xf32>
    tpu.vector_store %arg9[%c0_76, %c0_77], %477 {strides = array<i32>} : memref<8x4xf32, #tpu.memory_space<vmem>>, vector<8x4xf32>,
    return
  }
}

</mosaic_0001>

<llo_original>
// kernel: tpu_custom_call.1
$region0: #{tpu_custom_call.1}
  #allocation0 [shape = 'u32[]', space=smem, size = 0x4, offset = 0x4, fixed_abs, tag = 'smem constant byte address 0x4 - core index']
  #allocation1 [shape = 'u32[144,128]{1,0:T(1,128)}', space=vmem, size = 0x12000, scoped, tag = 'internal scratch']
  %s0 = inlined_call_operand.vmem [shape: s32[64,1], index: 0, kind: input, shape index: {}]
  %s1 = inlined_call_operand.vmem [shape: s32[8,1], index: 1, kind: input, shape index: {}]
  %s2 = inlined_call_operand.vmem [shape: f32[16,32], index: 2, kind: input, shape index: {}]
  %s3 = inlined_call_operand.vmem [shape: f32[2,32,96], index: 3, kind: input, shape index: {}]
  %s4 = inlined_call_operand.hbm [shape: f32[2,32,96], index: 4, kind: input, shape index: {}]
  %s5 = inlined_call_operand.vmem [shape: f32[2,1,96], index: 5, kind: input, shape index: {}]
  %s6 = inlined_call_operand.vmem [shape: f32[2,1,96], index: 6, kind: input, shape index: {}]
  %s7 = inlined_call_operand.vmem [shape: f32[32,4], index: 7, kind: input, shape index: {}]
  %s8 = inlined_call_operand.vmem [shape: f32[1,4], index: 8, kind: input, shape index: {}]
  %s9 = inlined_call_operand.vmem [shape: f32[8,4], index: 9, kind: output, shape index: {}]
  %s10 = sld [smem:[#allocation0]]
  $region50: #{tpu_custom_call.1} parent=0
    _
  %s12 = ssub.s32 1, %s10
  %s13 = scalar_select 0, %s12, %s10
  $region1: #{tpu_custom_call.1} parent=0
    #allocation2 [shape = 'u8[32768]{0}', space=vmem, size = 0x8000, scoped, tag = 'input window, operand 4, single buffered']
    #allocation3 [shape = 's32[1]{0}', space=sflag, size = 0x4, scoped, tag = 'scoped memory for tpu_custom_call.1']
    %14 = vsyncpa [#allocation3], 0
    // Predicated region
    $region2: #{tpu_custom_call.1} parent=1 // pred_check
      _
    $region3: #{tpu_custom_call.1} parent=1 // pred_check_branch
      %16 = sbr.rel (0) target = $region5
    $region4: #{tpu_custom_call.1} parent=1 // pred_region
      _
    $region5: #{tpu_custom_call.1} parent=1 // pred_fallthru
      _
    // Predicated region
    $region6: #{tpu_custom_call.1} parent=1 // pred_check
      _
    $region7: #{tpu_custom_call.1} parent=1 // pred_check_branch
      %18 = sbr.rel (0) target = $region9
    $region8: #{tpu_custom_call.1} parent=1 // pred_region
      _
    $region9: #{tpu_custom_call.1} parent=1 // pred_fallthru
      _
    // Predicated region
    $region10: #{tpu_custom_call.1} parent=1 // pred_check
      _
    $region11: #{tpu_custom_call.1} parent=1 // pred_check_branch
      %20 = sbr.rel (0) target = $region13
    $region12: #{tpu_custom_call.1} parent=1 // pred_region
      _
    $region13: #{tpu_custom_call.1} parent=1 // pred_fallthru
      _
    // Predicated region
    $region14: #{tpu_custom_call.1} parent=1 // pred_check
      _
    $region15: #{tpu_custom_call.1} parent=1 // pred_check_branch
      %22 = sbr.rel (0) target = $region17
    $region16: #{tpu_custom_call.1} parent=1 // pred_region
      _
    $region17: #{tpu_custom_call.1} parent=1 // pred_fallthru
      _
    // Predicated region
    $region18: #{tpu_custom_call.1} parent=1 // pred_check
      _
    $region19: #{tpu_custom_call.1} parent=1 // pred_check_branch
      %24 = sbr.rel (0) target = $region21
    $region20: #{tpu_custom_call.1} parent=1 // pred_region
      %s26 = ssub.s32 1024, 1024
      %27 = vsyncadd [#allocation3], %s26
      %s28 = sshll.u32 [#allocation2], 4
      %s29 = int_to_ptr.vmem [resolvable:$true] %s28
      %34 = dma.hbm_to_vmem [thread:$0]  %s4, 1024, %s29, [#allocation3], 128, 128, 8
    $region21: #{tpu_custom_call.1} parent=1 // pred_fallthru
      _
    // Predicated region
    $region22: #{tpu_custom_call.1} parent=1 // pred_check
      _
    $region23: #{tpu_custom_call.1} parent=1 // pred_check_branch
      %36 = sbr.rel (0) target = $region25
    $region24: #{tpu_custom_call.1} parent=1 // pred_region
      _
    $region25: #{tpu_custom_call.1} parent=1 // pred_fallthru
      _
    // Predicated region
    $region26: #{tpu_custom_call.1} parent=1 // pred_check
      _
    $region27: #{tpu_custom_call.1} parent=1 // pred_check_branch
      %38 = sbr.rel (0) target = $region29
    $region28: #{tpu_custom_call.1} parent=1 // pred_region
      _
    $region29: #{tpu_custom_call.1} parent=1 // pred_fallthru
      _
    // Predicated region
    $region30: #{tpu_custom_call.1} parent=1 // pred_check
      _
    $region31: #{tpu_custom_call.1} parent=1 // pred_check_branch
      %40 = sbr.rel (0) target = $region33
    $region32: #{tpu_custom_call.1} parent=1 // pred_region
      _
    $region33: #{tpu_custom_call.1} parent=1 // pred_fallthru
      _
    // Predicated region
    $region34: #{tpu_custom_call.1} parent=1 // pred_check
      _
    $region35: #{tpu_custom_call.1} parent=1 // pred_check_branch
      %42 = sbr.rel (0) target = $region37
    $region36: #{tpu_custom_call.1} parent=1 // pred_region
      _
    $region37: #{tpu_custom_call.1} parent=1 // pred_fallthru
      _
    // Predicated region
    $region38: #{tpu_custom_call.1} parent=1 // pred_check
      _
    $region39: #{tpu_custom_call.1} parent=1 // pred_check_branch
      %44 = sbr.rel (0) target = $region41
    $region40: #{tpu_custom_call.1} parent=1 // pred_region
      %45 = dma.done [#allocation3], 1024
    $region41: #{tpu_custom_call.1} parent=1 // pred_fallthru
      _
    %v47 = vlaneseq
    %v48 = vand.u32 %v47, 127
    %v49 = vld [vmem:[%s0] sm:$0xff]
    %v50 = vld [vmem:[%s0 + $0x8] sm:$0xff]
    %v51 = vld [vmem:[%s0 + $0x10] sm:$0xff]
    %v52 = vld [vmem:[%s0 + $0x18] sm:$0xff]
    %v53 = vld [vmem:[%s0 + $0x20] sm:$0xff]
    %v54 = vld [vmem:[%s0 + $0x28] sm:$0xff]
    %v55 = vld [vmem:[%s0 + $0x30] sm:$0xff]
    %v56 = vld [vmem:[%s0 + $0x38] sm:$0xff]
    %57 = vset.pattern.permute.xlu0 0
    %58 = vperm.xlu0 %57, %v49
    %v59 = vpop.permute.xlu0 %58
    %60 = vset.pattern.permute.xlu0 0
    %61 = vperm.xlu0 %60, %v50
    %v62 = vpop.permute.xlu0 %61
    %63 = vset.pattern.permute.xlu0 0
    %64 = vperm.xlu0 %63, %v51
    %v65 = vpop.permute.xlu0 %64
    %66 = vset.pattern.permute.xlu0 0
    %67 = vperm.xlu0 %66, %v52
    %v68 = vpop.permute.xlu0 %67
    %69 = vset.pattern.permute.xlu0 0
    %70 = vperm.xlu0 %69, %v53
    %v71 = vpop.permute.xlu0 %70
    %72 = vset.pattern.permute.xlu0 0
    %73 = vperm.xlu0 %72, %v54
    %v74 = vpop.permute.xlu0 %73
    %75 = vset.pattern.permute.xlu0 0
    %76 = vperm.xlu0 %75, %v55
    %v77 = vpop.permute.xlu0 %76
    %78 = vset.pattern.permute.xlu0 0
    %79 = vperm.xlu0 %78, %v56
    %v80 = vpop.permute.xlu0 %79
    %vm81 = vcmp.eq.s32.totalorder %v59, %v48
    %vm82 = vcmp.eq.s32.totalorder %v62, %v48
    %vm83 = vcmp.eq.s32.totalorder %v65, %v48
    %vm84 = vcmp.eq.s32.totalorder %v68, %v48
    %vm85 = vcmp.eq.s32.totalorder %v71, %v48
    %vm86 = vcmp.eq.s32.totalorder %v74, %v48
    %vm87 = vcmp.eq.s32.totalorder %v77, %v48
    %vm88 = vcmp.eq.s32.totalorder %v80, %v48
    %v89 = vsel %vm81, 1, 0
    %v90 = vsel %vm82, 1, 0
    %v91 = vsel %vm83, 1, 0
    %v92 = vsel %vm84, 1, 0
    %v93 = vsel %vm85, 1, 0
    %v94 = vsel %vm86, 1, 0
    %v95 = vsel %vm87, 1, 0
    %v96 = vsel %vm88, 1, 0
    %v97 = vcvt.s32.f32 %v89
    %v98 = vcvt.s32.f32 %v90
    %v99 = vcvt.s32.f32 %v91
    %v100 = vcvt.s32.f32 %v92
    %v101 = vcvt.s32.f32 %v93
    %v102 = vcvt.s32.f32 %v94
    %v103 = vcvt.s32.f32 %v95
    %v104 = vcvt.s32.f32 %v96
    %v105 = vld [vmem:[%s2] sm:$0xff]
    %v106 = vld [vmem:[%s2 + $0x8] sm:$0xff]
    %vm107 = vcmask 130048
    %v109 = vsel %vm107, %v97, 0
    %v112 = vsel %vm107, %v98, 0
    %v115 = vsel %vm107, %v99, 0
    %v118 = vsel %vm107, %v100, 0
    %v121 = vsel %vm107, %v101, 0
    %v124 = vsel %vm107, %v102, 0
    %v127 = vsel %vm107, %v103, 0
    %v130 = vsel %vm107, %v104, 0
    %132 = vmatprep.subr.mxu0 0.0
    %133 = vmatpush1.msra.mxu0 0.0
    %134 = vmatprep.subr.mxu0 0.0
    %135 = vmatpush1.msra.mxu0 0.0
    %136 = vmatprep.subr.mxu0 0.0
    %137 = vmatpush1.msra.mxu0 0.0
    %138 = vmatprep.subr.mxu0 0.0
    %139 = vmatpush1.msra.mxu0 0.0
    %140 = vmatprep.subr.mxu0 0.0
    %141 = vmatpush1.msra.mxu0 0.0
    %142 = vmatprep.subr.mxu0 0.0
    %143 = vmatpush1.msra.mxu0 0.0
    %144 = vmatprep.subr.mxu0 0.0
    %145 = vmatpush1.msra.mxu0 0.0
    %146 = vmatprep.subr.mxu0 0.0
    %147 = vmatpush1.msra.mxu0 0.0
    %148 = vmatprep.subr.mxu0 0.0
    %149 = vmatpush1.msra.mxu0 0.0
    %150 = vmatprep.subr.mxu0 0.0
    %151 = vmatpush1.msra.mxu0 0.0
    %152 = vmatprep.subr.mxu0 0.0
    %153 = vmatpush1.msra.mxu0 0.0
    %154 = vmatprep.subr.mxu0 0.0
    %155 = vmatpush1.msra.mxu0 0.0
    %156 = vmatprep.subr.mxu0 0.0
    %157 = vmatpush1.msra.mxu0 0.0
    %158 = vmatprep.subr.mxu0 0.0
    %159 = vmatpush1.msra.mxu0 0.0
    %160 = vmatprep.subr.mxu0 0.0
    %161 = vmatpush1.msra.mxu0 %v106
    %162 = vmatprep.subr.mxu0 0.0
    %163 = vmatpush1.msra.mxu0 %v105
    %164 = vmatprep.subr.mxu0 0.0
    %165 = vmatpush2.msra.mxu0 0.0
    %166 = vmatprep.subr.mxu0 0.0
    %167 = vmatpush2.msra.mxu0 0.0
    %168 = vmatprep.subr.mxu0 0.0
    %169 = vmatpush2.msra.mxu0 0.0
    %170 = vmatprep.subr.mxu0 0.0
    %171 = vmatpush2.msra.mxu0 0.0
    %172 = vmatprep.subr.mxu0 0.0
    %173 = vmatpush2.msra.mxu0 0.0
    %174 = vmatprep.subr.mxu0 0.0
    %175 = vmatpush2.msra.mxu0 0.0
    %176 = vmatprep.subr.mxu0 0.0
    %177 = vmatpush2.msra.mxu0 0.0
    %178 = vmatprep.subr.mxu0 0.0
    %179 = vmatpush2.msra.mxu0 0.0
    %180 = vmatprep.subr.mxu0 0.0
    %181 = vmatpush2.msra.mxu0 0.0
    %182 = vmatprep.subr.mxu0 0.0
    %183 = vmatpush2.msra.mxu0 0.0
    %184 = vmatprep.subr.mxu0 0.0
    %185 = vmatpush2.msra.mxu0 0.0
    %186 = vmatprep.subr.mxu0 0.0
    %187 = vmatpush2.msra.mxu0 0.0
    %188 = vmatprep.subr.mxu0 0.0
    %189 = vmatpush2.msra.mxu0 0.0
    %190 = vmatprep.subr.mxu0 0.0
    %191 = vmatpush2.msra.mxu0 0.0
    %192 = vmatprep.subr.mxu0 0.0
    %193 = vmatpush2.msra.mxu0 0.0
    %194 = vmatprep.subr.mxu0 0.0
    %195 = vmatpush2.msra.mxu0 0.0
    %196 = vmatprep.mubr.f32.mxu0 0.0
    %197 = vmatmul.mubr.f32.gmra.mxu0 %v109
    %v198 = vpop.f32.mrf.mxu0
    %v199 = vadd.f32 0.0, %v198
    %v200 = vpop.f32.mrf.mxu0
    %201 = vmatprep.mubr.f32.mxu0 0.0
    %202 = vmatmul.mubr.f32.gmra.mxu0 %v112
    %v203 = vpop.f32.mrf.mxu0
    %v204 = vadd.f32 0.0, %v203
    %v205 = vpop.f32.mrf.mxu0
    %206 = vmatprep.mubr.f32.mxu0 0.0
    %207 = vmatmul.mubr.f32.gmra.mxu0 %v115
    %v208 = vpop.f32.mrf.mxu0
    %v209 = vadd.f32 0.0, %v208
    %v210 = vpop.f32.mrf.mxu0
    %211 = vmatprep.mubr.f32.mxu0 0.0
    %212 = vmatmul.mubr.f32.gmra.mxu0 %v118
    %v213 = vpop.f32.mrf.mxu0
    %v214 = vadd.f32 0.0, %v213
    %v215 = vpop.f32.mrf.mxu0
    %216 = vmatprep.mubr.f32.mxu0 0.0
    %217 = vmatmul.mubr.f32.gmra.mxu0 %v121
    %v218 = vpop.f32.mrf.mxu0
    %v219 = vadd.f32 0.0, %v218
    %v220 = vpop.f32.mrf.mxu0
    %221 = vmatprep.mubr.f32.mxu0 0.0
    %222 = vmatmul.mubr.f32.gmra.mxu0 %v124
    %v223 = vpop.f32.mrf.mxu0
    %v224 = vadd.f32 0.0, %v223
    %v225 = vpop.f32.mrf.mxu0
    %226 = vmatprep.mubr.f32.mxu0 0.0
    %227 = vmatmul.mubr.f32.gmra.mxu0 %v127
    %v228 = vpop.f32.mrf.mxu0
    %v229 = vadd.f32 0.0, %v228
    %v230 = vpop.f32.mrf.mxu0
    %231 = vmatprep.mubr.f32.mxu0 0.0
    %232 = vmatmul.mubr.f32.gmra.mxu0 %v130
    %v233 = vpop.f32.mrf.mxu0
    %v234 = vadd.f32 0.0, %v233
    %v235 = vpop.f32.mrf.mxu0
    %236 = vdwg.mxu0
    %v237 = vld [vmem:[%s1] sm:$0xff]
    %vm238 = vcmp.gt.s32.totalorder %v237, 0
    %vm239 = vcmp.gt.s32.totalorder %v237, 1
    %vm240 = vcmp.gt.s32.totalorder %v237, 2
    %vm241 = vcmp.gt.s32.totalorder %v237, 3
    %vm242 = vcmp.gt.s32.totalorder %v237, 4
    %vm243 = vcmp.gt.s32.totalorder %v237, 5
    %vm244 = vcmp.gt.s32.totalorder %v237, 6
    %vm245 = vcmp.gt.s32.totalorder %v237, 7
    %v246 = vld [vmem:[%s3] sm:$0xff]
    %v247 = vld [vmem:[%s3 + $0x8] sm:$0xff]
    %v248 = vld [vmem:[%s3 + $0x10] sm:$0xff]
    %v249 = vld [vmem:[%s3 + $0x18] sm:$0xff]
    %v250 = vpack.c.bf16 %v247, %v246
    %v251 = vpack.c.bf16 %v249, %v248
    %s252 = scalar_lea.vmem %s3, 32
    %v253 = vld [vmem:[%s252] sm:$0xff]
    %v254 = vld [vmem:[%s252 + $0x8] sm:$0xff]
    %v255 = vld [vmem:[%s252 + $0x10] sm:$0xff]
    %v256 = vld [vmem:[%s252 + $0x18] sm:$0xff]
    %v257 = vpack.c.bf16 %v254, %v253
    %v258 = vpack.c.bf16 %v256, %v255
    %v259 = vld [vmem:[#allocation2] sm:$0xff]
    %v260 = vld [vmem:[#allocation2 + $0x8] sm:$0xff]
    %v261 = vld [vmem:[#allocation2 + $0x10] sm:$0xff]
    %v262 = vld [vmem:[#allocation2 + $0x18] sm:$0xff]
    %v263 = vpack.c.bf16 %v260, %v259
    %v264 = vpack.c.bf16 %v262, %v261
    %s265 = scalar_lea.vmem [#allocation2], 32
    %v266 = vld [vmem:[%s265] sm:$0xff]
    %v267 = vld [vmem:[%s265 + $0x8] sm:$0xff]
    %v268 = vld [vmem:[%s265 + $0x10] sm:$0xff]
    %v269 = vld [vmem:[%s265 + $0x18] sm:$0xff]
    %v270 = vpack.c.bf16 %v267, %v266
    %v271 = vpack.c.bf16 %v269, %v268
    %s272 = scalar_lea.vmem %s5, 1
    %v273 = vld [vmem:[%s272] sm:$0x1]
    %v275 = vlaneseq
    %v276 = vshrl.u32 %v275, 7
    %v277 = vsub.s32 0, %v276
    %v278 = vrot.slane %v273, %v277
    %v280 = vld [vmem:[%s6] sm:$0x1]
    %v282 = vlaneseq
    %v283 = vshrl.u32 %v282, 7
    %v284 = vsub.s32 0, %v283
    %v285 = vrot.slane %v280, %v284
    %s287 = scalar_lea.vmem %s6, 1
    %v288 = vld [vmem:[%s287] sm:$0x1]
    %v290 = vlaneseq
    %v291 = vshrl.u32 %v290, 7
    %v292 = vsub.s32 0, %v291
    %v293 = vrot.slane %v288, %v292
    %v295 = vpack.c.bf16 %v204, %v199
    %v296 = vpack.c.bf16 %v214, %v209
    %v297 = vpack.c.bf16 %v224, %v219
    %v298 = vpack.c.bf16 %v234, %v229
    %v299 = vld [vmem:[%s5] sm:$0x1]
    %v301 = vlaneseq
    %v302 = vshrl.u32 %v301, 7
    %v303 = vsub.s32 0, %v302
    %v304 = vrot.slane %v299, %v303
    %vm306 = vcmask 261120
    %v308 = vsel %vm306, %v295, 0
    %v311 = vsel %vm306, %v296, 0
    %v314 = vsel %vm306, %v297, 0
    %v317 = vsel %vm306, %v298, 0
    %319 = vmatprep.subr.bf16.mxu0 0
    %320 = vmatpush1.bf16.msra.mxu0 0
    %321 = vmatprep.subr.bf16.mxu0 0
    %322 = vmatpush1.bf16.msra.mxu0 0
    %323 = vmatprep.subr.bf16.mxu0 0
    %324 = vmatpush1.bf16.msra.mxu0 0
    %325 = vmatprep.subr.bf16.mxu0 0
    %326 = vmatpush1.bf16.msra.mxu0 0
    %327 = vmatprep.subr.bf16.mxu0 0
    %328 = vmatpush1.bf16.msra.mxu0 0
    %329 = vmatprep.subr.bf16.mxu0 0
    %330 = vmatpush1.bf16.msra.mxu0 0
    %331 = vmatprep.subr.bf16.mxu0 0
    %332 = vmatpush1.bf16.msra.mxu0 %v251
    %333 = vmatprep.subr.bf16.mxu0 0
    %334 = vmatpush1.bf16.msra.mxu0 %v250
    %335 = vmatprep.subr.bf16.mxu0 0
    %336 = vmatpush2.bf16.msra.mxu0 0
    %337 = vmatprep.subr.bf16.mxu0 0
    %338 = vmatpush2.bf16.msra.mxu0 0
    %339 = vmatprep.subr.bf16.mxu0 0
    %340 = vmatpush2.bf16.msra.mxu0 0
    %341 = vmatprep.subr.bf16.mxu0 0
    %342 = vmatpush2.bf16.msra.mxu0 0
    %343 = vmatprep.subr.bf16.mxu0 0
    %344 = vmatpush2.bf16.msra.mxu0 0
    %345 = vmatprep.subr.bf16.mxu0 0
    %346 = vmatpush2.bf16.msra.mxu0 0
    %347 = vmatprep.subr.bf16.mxu0 0
    %348 = vmatpush2.bf16.msra.mxu0 0
    %349 = vmatprep.subr.bf16.mxu0 0
    %350 = vmatpush2.bf16.msra.mxu0 0
    %351 = vmatprep.mubr.bf16.mxu0 0
    %352 = vmatmul.mubr.bf16.gmra.mxu0 %v308
    %v353 = vpop.f32.mrf.mxu0
    %v354 = vadd.f32 %v304, %v353
    %v355 = vpop.f32.mrf.mxu0
    %v356 = vpop.f32.mrf.mxu0
    %v357 = vadd.f32 %v304, %v356
    %v358 = vpop.f32.mrf.mxu0
    %359 = vmatprep.mubr.bf16.mxu0 0
    %360 = vmatmul.mubr.bf16.gmra.mxu0 %v311
    %v361 = vpop.f32.mrf.mxu0
    %v362 = vadd.f32 %v304, %v361
    %v363 = vpop.f32.mrf.mxu0
    %v364 = vpop.f32.mrf.mxu0
    %v365 = vadd.f32 %v304, %v364
    %v366 = vpop.f32.mrf.mxu0
    %367 = vmatprep.mubr.bf16.mxu0 0
    %368 = vmatmul.mubr.bf16.gmra.mxu0 %v314
    %v369 = vpop.f32.mrf.mxu0
    %v370 = vadd.f32 %v304, %v369
    %v371 = vpop.f32.mrf.mxu0
    %v372 = vpop.f32.mrf.mxu0
    %v373 = vadd.f32 %v304, %v372
    %v374 = vpop.f32.mrf.mxu0
    %375 = vmatprep.mubr.bf16.mxu0 0
    %376 = vmatmul.mubr.bf16.gmra.mxu0 %v317
    %v377 = vpop.f32.mrf.mxu0
    %v378 = vadd.f32 %v304, %v377
    %v379 = vpop.f32.mrf.mxu0
    %v380 = vpop.f32.mrf.mxu0
    %v381 = vadd.f32 %v304, %v380
    %v382 = vpop.f32.mrf.mxu0
    %383 = vdwg.mxu0
    %v385 = vsel %vm306, 0, 0
    %387 = vmatprep.subr.bf16.mxu0 0
    %388 = vmatpush1.bf16.msra.mxu0 0
    %389 = vmatprep.subr.bf16.mxu0 0
    %390 = vmatpush1.bf16.msra.mxu0 0
    %391 = vmatprep.subr.bf16.mxu0 0
    %392 = vmatpush1.bf16.msra.mxu0 0
    %393 = vmatprep.subr.bf16.mxu0 0
    %394 = vmatpush1.bf16.msra.mxu0 0
    %395 = vmatprep.subr.bf16.mxu0 0
    %396 = vmatpush1.bf16.msra.mxu0 0
    %397 = vmatprep.subr.bf16.mxu0 0
    %398 = vmatpush1.bf16.msra.mxu0 0
    %399 = vmatprep.subr.bf16.mxu0 0
    %400 = vmatpush1.bf16.msra.mxu0 %v264
    %401 = vmatprep.subr.bf16.mxu0 0
    %402 = vmatpush1.bf16.msra.mxu0 %v263
    %403 = vmatprep.subr.bf16.mxu0 0
    %404 = vmatpush2.bf16.msra.mxu0 0
    %405 = vmatprep.subr.bf16.mxu0 0
    %406 = vmatpush2.bf16.msra.mxu0 0
    %407 = vmatprep.subr.bf16.mxu0 0
    %408 = vmatpush2.bf16.msra.mxu0 0
    %409 = vmatprep.subr.bf16.mxu0 0
    %410 = vmatpush2.bf16.msra.mxu0 0
    %411 = vmatprep.subr.bf16.mxu0 0
    %412 = vmatpush2.bf16.msra.mxu0 0
    %413 = vmatprep.subr.bf16.mxu0 0
    %414 = vmatpush2.bf16.msra.mxu0 0
    %415 = vmatprep.subr.bf16.mxu0 0
    %416 = vmatpush2.bf16.msra.mxu0 0
    %417 = vmatprep.subr.bf16.mxu0 0
    %418 = vmatpush2.bf16.msra.mxu0 0
    %419 = vmatprep.mubr.bf16.mxu0 0
    %420 = vmatmul.mubr.bf16.gmra.mxu0 %v385
    %v421 = vpop.f32.mrf.mxu0
    %v422 = vadd.f32 %v285, %v421
    %v423 = vpop.f32.mrf.mxu0
    %v424 = vpop.f32.mrf.mxu0
    %v425 = vpop.f32.mrf.mxu0
    %426 = vdwg.mxu0
    %v427 = vadd.f32 %v354, %v422
    %v428 = vxor.u32 %v427, 2147483648
    %v429 = vmul.f32 %v428, 1.442695
    %v430 = vpow.pop %v429
    %v431 = vadd.f32 %v430, 1.0
    %v432 = vrcp.pop %v431
    %v433 = vmul.f32 1.0, %v432
    %435 = vrot.lane.b32.xlu0 %v422, 64
    %v436 = vpop.permute.xlu0 %435
    %v438 = vmul.f32 %v433, %v436
    %440 = vrot.lane.b32.xlu0 %v438, 64
    %v441 = vpop.permute.xlu0 %440
    %v443 = vadd.f32 %v354, %v441
    %v444 = vtanh.pop %v443
    %v445 = vsub.f32 0.0, %v444
    %447 = vrot.lane.b32.xlu0 %v445, 96
    %v448 = vpop.permute.xlu0 %447
    %v450 = vmul.f32 %v433, %v448
    %452 = vrot.lane.b32.xlu0 %v450, 32
    %v453 = vpop.permute.xlu0 %452
    %v455 = vadd.f32 %v444, %v453
    %v456 = vsel %vm238, 1, 0
    %457 = vset.pattern.permute.xlu0 0
    %458 = vperm.xlu0 %457, %v456
    %v459 = vpop.permute.xlu0 %458
    %vm460 = vcmp.eq.s32.totalorder %v459, 1
    %v461 = vsel %vm460, %v455, 0.0
    %v462 = vpack.c.bf16 %v461, %v461
    %464 = vrot.lane.b32.xlu0 %v462, 64
    %v465 = vpop.permute.xlu0 %464
    %v467 = vsel %vm306, %v465, 0
    %469 = vmatprep.subr.bf16.mxu0 0
    %470 = vmatpush1.bf16.msra.mxu0 0
    %471 = vmatprep.subr.bf16.mxu0 0
    %472 = vmatpush1.bf16.msra.mxu0 0
    %473 = vmatprep.subr.bf16.mxu0 0
    %474 = vmatpush1.bf16.msra.mxu0 0
    %475 = vmatprep.subr.bf16.mxu0 0
    %476 = vmatpush1.bf16.msra.mxu0 0
    %477 = vmatprep.subr.bf16.mxu0 0
    %478 = vmatpush1.bf16.msra.mxu0 0
    %479 = vmatprep.subr.bf16.mxu0 0
    %480 = vmatpush1.bf16.msra.mxu0 0
    %481 = vmatprep.subr.bf16.mxu0 0
    %482 = vmatpush1.bf16.msra.mxu0 %v258
    %483 = vmatprep.subr.bf16.mxu0 0
    %484 = vmatpush1.bf16.msra.mxu0 %v257
    %485 = vmatprep.subr.bf16.mxu0 0
    %486 = vmatpush2.bf16.msra.mxu0 0
    %487 = vmatprep.subr.bf16.mxu0 0
    %488 = vmatpush2.bf16.msra.mxu0 0
    %489 = vmatprep.subr.bf16.mxu0 0
    %490 = vmatpush2.bf16.msra.mxu0 0
    %491 = vmatprep.subr.bf16.mxu0 0
    %492 = vmatpush2.bf16.msra.mxu0 0
    %493 = vmatprep.subr.bf16.mxu0 0
    %494 = vmatpush2.bf16.msra.mxu0 0
    %495 = vmatprep.subr.bf16.mxu0 0
    %496 = vmatpush2.bf16.msra.mxu0 0
    %497 = vmatprep.subr.bf16.mxu0 0
    %498 = vmatpush2.bf16.msra.mxu0 0
    %499 = vmatprep.subr.bf16.mxu0 0
    %500 = vmatpush2.bf16.msra.mxu0 0
    %501 = vmatprep.mubr.bf16.mxu0 0
    %502 = vmatmul.mubr.bf16.gmra.mxu0 %v467
    %v503 = vpop.f32.mrf.mxu0
    %v504 = vadd.f32 %v278, %v503
    %v505 = vpop.f32.mrf.mxu0
    %v506 = vpop.f32.mrf.mxu0
    %v507 = vpop.f32.mrf.mxu0
    %508 = vdwg.mxu0
    %509 = vmatprep.subr.bf16.mxu0 0
    %510 = vmatpush1.bf16.msra.mxu0 0
    %511 = vmatprep.subr.bf16.mxu0 0
    %512 = vmatpush1.bf16.msra.mxu0 0
    %513 = vmatprep.subr.bf16.mxu0 0
    %514 = vmatpush1.bf16.msra.mxu0 0
    %515 = vmatprep.subr.bf16.mxu0 0
    %516 = vmatpush1.bf16.msra.mxu0 0
    %517 = vmatprep.subr.bf16.mxu0 0
    %518 = vmatpush1.bf16.msra.mxu0 0
    %519 = vmatprep.subr.bf16.mxu0 0
    %520 = vmatpush1.bf16.msra.mxu0 0
    %521 = vmatprep.subr.bf16.mxu0 0
    %522 = vmatpush1.bf16.msra.mxu0 %v271
    %523 = vmatprep.subr.bf16.mxu0 0
    %524 = vmatpush1.bf16.msra.mxu0 %v270
    %525 = vmatprep.subr.bf16.mxu0 0
    %526 = vmatpush2.bf16.msra.mxu0 0
    %527 = vmatprep.subr.bf16.mxu0 0
    %528 = vmatpush2.bf16.msra.mxu0 0
    %529 = vmatprep.subr.bf16.mxu0 0
    %530 = vmatpush2.bf16.msra.mxu0 0
    %531 = vmatprep.subr.bf16.mxu0 0
    %532 = vmatpush2.bf16.msra.mxu0 0
    %533 = vmatprep.subr.bf16.mxu0 0
    %534 = vmatpush2.bf16.msra.mxu0 0
    %535 = vmatprep.subr.bf16.mxu0 0
    %536 = vmatpush2.bf16.msra.mxu0 0
    %537 = vmatprep.subr.bf16.mxu0 0
    %538 = vmatpush2.bf16.msra.mxu0 0
    %539 = vmatprep.subr.bf16.mxu0 0
    %540 = vmatpush2.bf16.msra.mxu0 0
    %541 = vmatprep.mubr.bf16.mxu0 0
    %542 = vmatmul.mubr.bf16.gmra.mxu0 %v385
    %v543 = vpop.f32.mrf.mxu0
    %v544 = vadd.f32 %v293, %v543
    %v545 = vpop.f32.mrf.mxu0
    %v546 = vpop.f32.mrf.mxu0
    %v547 = vpop.f32.mrf.mxu0
    %548 = vdwg.mxu0
    %v549 = vadd.f32 %v504, %v544
    %v550 = vxor.u32 %v549, 2147483648
    %v551 = vmul.f32 %v550, 1.442695
    %v552 = vpow.pop %v551
    %v553 = vadd.f32 %v552, 1.0
    %v554 = vrcp.pop %v553
    %v555 = vmul.f32 1.0, %v554
    %557 = vrot.lane.b32.xlu0 %v544, 64
    %v558 = vpop.permute.xlu0 %557
    %v560 = vmul.f32 %v555, %v558
    %562 = vrot.lane.b32.xlu0 %v560, 64
    %v563 = vpop.permute.xlu0 %562
    %v565 = vadd.f32 %v504, %v563
    %v566 = vtanh.pop %v565
    %v567 = vsub.f32 0.0, %v566
    %569 = vrot.lane.b32.xlu0 %v567, 96
    %v570 = vpop.permute.xlu0 %569
    %v572 = vmul.f32 %v555, %v570
    %574 = vrot.lane.b32.xlu0 %v572, 32
    %v575 = vpop.permute.xlu0 %574
    %v577 = vadd.f32 %v566, %v575
    %v578 = vsel %vm460, %v577, 0.0
    %579 = vmatprep.subr.bf16.mxu0 0
    %580 = vmatpush1.bf16.msra.mxu0 0
    %581 = vmatprep.subr.bf16.mxu0 0
    %582 = vmatpush1.bf16.msra.mxu0 0
    %583 = vmatprep.subr.bf16.mxu0 0
    %584 = vmatpush1.bf16.msra.mxu0 0
    %585 = vmatprep.subr.bf16.mxu0 0
    %586 = vmatpush1.bf16.msra.mxu0 0
    %587 = vmatprep.subr.bf16.mxu0 0
    %588 = vmatpush1.bf16.msra.mxu0 0
    %589 = vmatprep.subr.bf16.mxu0 0
    %590 = vmatpush1.bf16.msra.mxu0 0
    %591 = vmatprep.subr.bf16.mxu0 0
    %592 = vmatpush1.bf16.msra.mxu0 %v264
    %593 = vmatprep.subr.bf16.mxu0 0
    %594 = vmatpush1.bf16.msra.mxu0 %v263
    %595 = vmatprep.subr.bf16.mxu0 0
    %596 = vmatpush2.bf16.msra.mxu0 0
    %597 = vmatprep.subr.bf16.mxu0 0
    %598 = vmatpush2.bf16.msra.mxu0 0
    %599 = vmatprep.subr.bf16.mxu0 0
    %600 = vmatpush2.bf16.msra.mxu0 0
    %601 = vmatprep.subr.bf16.mxu0 0
    %602 = vmatpush2.bf16.msra.mxu0 0
    %603 = vmatprep.subr.bf16.mxu0 0
    %604 = vmatpush2.bf16.msra.mxu0 0
    %605 = vmatprep.subr.bf16.mxu0 0
    %606 = vmatpush2.bf16.msra.mxu0 0
    %607 = vmatprep.subr.bf16.mxu0 0
    %608 = vmatpush2.bf16.msra.mxu0 0
    %609 = vmatprep.subr.bf16.mxu0 0
    %610 = vmatpush2.bf16.msra.mxu0 0
    %611 = vmatprep.mubr.bf16.mxu0 0
    %612 = vmatmul.mubr.bf16.gmra.mxu0 %v467
    %v613 = vpop.f32.mrf.mxu0
    %v614 = vadd.f32 %v285, %v613
    %v615 = vpop.f32.mrf.mxu0
    %v616 = vpop.f32.mrf.mxu0
    %v617 = vpop.f32.mrf.mxu0
    %618 = vdwg.mxu0
    %v619 = vadd.f32 %v357, %v614
    %v620 = vxor.u32 %v619, 2147483648
    %v621 = vmul.f32 %v620, 1.442695
    %v622 = vpow.pop %v621
    %v623 = vadd.f32 %v622, 1.0
    %v624 = vrcp.pop %v623
    %v625 = vmul.f32 1.0, %v624
    %627 = vrot.lane.b32.xlu0 %v614, 64
    %v628 = vpop.permute.xlu0 %627
    %v630 = vmul.f32 %v625, %v628
    %632 = vrot.lane.b32.xlu0 %v630, 64
    %v633 = vpop.permute.xlu0 %632
    %v635 = vadd.f32 %v357, %v633
    %v636 = vtanh.pop %v635
    %v637 = vsub.f32 %v461, %v636
    %639 = vrot.lane.b32.xlu0 %v637, 96
    %v640 = vpop.permute.xlu0 %639
    %v642 = vmul.f32 %v625, %v640
    %644 = vrot.lane.b32.xlu0 %v642, 32
    %v645 = vpop.permute.xlu0 %644
    %v647 = vadd.f32 %v636, %v645
    %v648 = vsel %vm239, 1, 0
    %649 = vset.pattern.permute.xlu0 0
    %650 = vperm.xlu0 %649, %v648
    %v651 = vpop.permute.xlu0 %650
    %vm652 = vcmp.eq.s32.totalorder %v651, 1
    %v653 = vsel %vm652, %v647, %v461
    %v654 = vpack.c.bf16 %v653, %v653
    %656 = vrot.lane.b32.xlu0 %v654, 64
    %v657 = vpop.permute.xlu0 %656
    %v659 = vsel %vm306, %v657, 0
    %661 = vmatprep.subr.bf16.mxu0 0
    %662 = vmatpush1.bf16.msra.mxu0 0
    %663 = vmatprep.subr.bf16.mxu0 0
    %664 = vmatpush1.bf16.msra.mxu0 0
    %665 = vmatprep.subr.bf16.mxu0 0
    %666 = vmatpush1.bf16.msra.mxu0 0
    %667 = vmatprep.subr.bf16.mxu0 0
    %668 = vmatpush1.bf16.msra.mxu0 0
    %669 = vmatprep.subr.bf16.mxu0 0
    %670 = vmatpush1.bf16.msra.mxu0 0
    %671 = vmatprep.subr.bf16.mxu0 0
    %672 = vmatpush1.bf16.msra.mxu0 0
    %673 = vmatprep.subr.bf16.mxu0 0
    %674 = vmatpush1.bf16.msra.mxu0 %v258
    %675 = vmatprep.subr.bf16.mxu0 0
    %676 = vmatpush1.bf16.msra.mxu0 %v257
    %677 = vmatprep.subr.bf16.mxu0 0
    %678 = vmatpush2.bf16.msra.mxu0 0
    %679 = vmatprep.subr.bf16.mxu0 0
    %680 = vmatpush2.bf16.msra.mxu0 0
    %681 = vmatprep.subr.bf16.mxu0 0
    %682 = vmatpush2.bf16.msra.mxu0 0
    %683 = vmatprep.subr.bf16.mxu0 0
    %684 = vmatpush2.bf16.msra.mxu0 0
    %685 = vmatprep.subr.bf16.mxu0 0
    %686 = vmatpush2.bf16.msra.mxu0 0
    %687 = vmatprep.subr.bf16.mxu0 0
    %688 = vmatpush2.bf16.msra.mxu0 0
    %689 = vmatprep.subr.bf16.mxu0 0
    %690 = vmatpush2.bf16.msra.mxu0 0
    %691 = vmatprep.subr.bf16.mxu0 0
    %692 = vmatpush2.bf16.msra.mxu0 0
    %693 = vmatprep.mubr.bf16.mxu0 0
    %694 = vmatmul.mubr.bf16.gmra.mxu0 %v659
    %v695 = vpop.f32.mrf.mxu0
    %v696 = vadd.f32 %v278, %v695
    %v697 = vpop.f32.mrf.mxu0
    %v698 = vpop.f32.mrf.mxu0
    %v699 = vpop.f32.mrf.mxu0
    %700 = vdwg.mxu0
    %v701 = vpack.c.bf16 %v578, %v578
    %703 = vrot.lane.b32.xlu0 %v701, 64
    %v704 = vpop.permute.xlu0 %703
    %v706 = vsel %vm306, %v704, 0
    %708 = vmatprep.subr.bf16.mxu0 0
    %709 = vmatpush1.bf16.msra.mxu0 0
    %710 = vmatprep.subr.bf16.mxu0 0
    %711 = vmatpush1.bf16.msra.mxu0 0
    %712 = vmatprep.subr.bf16.mxu0 0
    %713 = vmatpush1.bf16.msra.mxu0 0
    %714 = vmatprep.subr.bf16.mxu0 0
    %715 = vmatpush1.bf16.msra.mxu0 0
    %716 = vmatprep.subr.bf16.mxu0 0
    %717 = vmatpush1.bf16.msra.mxu0 0
    %718 = vmatprep.subr.bf16.mxu0 0
    %719 = vmatpush1.bf16.msra.mxu0 0
    %720 = vmatprep.subr.bf16.mxu0 0
    %721 = vmatpush1.bf16.msra.mxu0 %v271
    %722 = vmatprep.subr.bf16.mxu0 0
    %723 = vmatpush1.bf16.msra.mxu0 %v270
    %724 = vmatprep.subr.bf16.mxu0 0
    %725 = vmatpush2.bf16.msra.mxu0 0
    %726 = vmatprep.subr.bf16.mxu0 0
    %727 = vmatpush2.bf16.msra.mxu0 0
    %728 = vmatprep.subr.bf16.mxu0 0
    %729 = vmatpush2.bf16.msra.mxu0 0
    %730 = vmatprep.subr.bf16.mxu0 0
    %731 = vmatpush2.bf16.msra.mxu0 0
    %732 = vmatprep.subr.bf16.mxu0 0
    %733 = vmatpush2.bf16.msra.mxu0 0
    %734 = vmatprep.subr.bf16.mxu0 0
    %735 = vmatpush2.bf16.msra.mxu0 0
    %736 = vmatprep.subr.bf16.mxu0 0
    %737 = vmatpush2.bf16.msra.mxu0 0
    %738 = vmatprep.subr.bf16.mxu0 0
    %739 = vmatpush2.bf16.msra.mxu0 0
    %740 = vmatprep.mubr.bf16.mxu0 0
    %741 = vmatmul.mubr.bf16.gmra.mxu0 %v706
    %v742 = vpop.f32.mrf.mxu0
    %v743 = vadd.f32 %v293, %v742
    %v744 = vpop.f32.mrf.mxu0
    %v745 = vpop.f32.mrf.mxu0
    %v746 = vpop.f32.mrf.mxu0
    %747 = vdwg.mxu0
    %v748 = vadd.f32 %v696, %v743
    %v749 = vxor.u32 %v748, 2147483648
    %v750 = vmul.f32 %v749, 1.442695
    %v751 = vpow.pop %v750
    %v752 = vadd.f32 %v751, 1.0
    %v753 = vrcp.pop %v752
    %v754 = vmul.f32 1.0, %v753
    %756 = vrot.lane.b32.xlu0 %v743, 64
    %v757 = vpop.permute.xlu0 %756
    %v759 = vmul.f32 %v754, %v757
    %761 = vrot.lane.b32.xlu0 %v759, 64
    %v762 = vpop.permute.xlu0 %761
    %v764 = vadd.f32 %v696, %v762
    %v765 = vtanh.pop %v764
    %v766 = vsub.f32 %v578, %v765
    %768 = vrot.lane.b32.xlu0 %v766, 96
    %v769 = vpop.permute.xlu0 %768
    %v771 = vmul.f32 %v754, %v769
    %773 = vrot.lane.b32.xlu0 %v771, 32
    %v774 = vpop.permute.xlu0 %773
    %v776 = vadd.f32 %v765, %v774
    %v777 = vsel %vm652, %v776, %v578
    %778 = vmatprep.subr.bf16.mxu0 0
    %779 = vmatpush1.bf16.msra.mxu0 0
    %780 = vmatprep.subr.bf16.mxu0 0
    %781 = vmatpush1.bf16.msra.mxu0 0
    %782 = vmatprep.subr.bf16.mxu0 0
    %783 = vmatpush1.bf16.msra.mxu0 0
    %784 = vmatprep.subr.bf16.mxu0 0
    %785 = vmatpush1.bf16.msra.mxu0 0
    %786 = vmatprep.subr.bf16.mxu0 0
    %787 = vmatpush1.bf16.msra.mxu0 0
    %788 = vmatprep.subr.bf16.mxu0 0
    %789 = vmatpush1.bf16.msra.mxu0 0
    %790 = vmatprep.subr.bf16.mxu0 0
    %791 = vmatpush1.bf16.msra.mxu0 %v264
    %792 = vmatprep.subr.bf16.mxu0 0
    %793 = vmatpush1.bf16.msra.mxu0 %v263
    %794 = vmatprep.subr.bf16.mxu0 0
    %795 = vmatpush2.bf16.msra.mxu0 0
    %796 = vmatprep.subr.bf16.mxu0 0
    %797 = vmatpush2.bf16.msra.mxu0 0
    %798 = vmatprep.subr.bf16.mxu0 0
    %799 = vmatpush2.bf16.msra.mxu0 0
    %800 = vmatprep.subr.bf16.mxu0 0
    %801 = vmatpush2.bf16.msra.mxu0 0
    %802 = vmatprep.subr.bf16.mxu0 0
    %803 = vmatpush2.bf16.msra.mxu0 0
    %804 = vmatprep.subr.bf16.mxu0 0
    %805 = vmatpush2.bf16.msra.mxu0 0
    %806 = vmatprep.subr.bf16.mxu0 0
    %807 = vmatpush2.bf16.msra.mxu0 0
    %808 = vmatprep.subr.bf16.mxu0 0
    %809 = vmatpush2.bf16.msra.mxu0 0
    %810 = vmatprep.mubr.bf16.mxu0 0
    %811 = vmatmul.mubr.bf16.gmra.mxu0 %v659
    %v812 = vpop.f32.mrf.mxu0
    %v813 = vadd.f32 %v285, %v812
    %v814 = vpop.f32.mrf.mxu0
    %v815 = vpop.f32.mrf.mxu0
    %v816 = vpop.f32.mrf.mxu0
    %817 = vdwg.mxu0
    %v818 = vadd.f32 %v362, %v813
    %v819 = vxor.u32 %v818, 2147483648
    %v820 = vmul.f32 %v819, 1.442695
    %v821 = vpow.pop %v820
    %v822 = vadd.f32 %v821, 1.0
    %v823 = vrcp.pop %v822
    %v824 = vmul.f32 1.0, %v823
    %826 = vrot.lane.b32.xlu0 %v813, 64
    %v827 = vpop.permute.xlu0 %826
    %v829 = vmul.f32 %v824, %v827
    %831 = vrot.lane.b32.xlu0 %v829, 64
    %v832 = vpop.permute.xlu0 %831
    %v834 = vadd.f32 %v362, %v832
    %v835 = vtanh.pop %v834
    %v836 = vsub.f32 %v653, %v835
    %838 = vrot.lane.b32.xlu0 %v836, 96
    %v839 = vpop.permute.xlu0 %838
    %v841 = vmul.f32 %v824, %v839
    %843 = vrot.lane.b32.xlu0 %v841, 32
    %v844 = vpop.permute.xlu0 %843
    %v846 = vadd.f32 %v835, %v844
    %v847 = vsel %vm240, 1, 0
    %848 = vset.pattern.permute.xlu0 0
    %849 = vperm.xlu0 %848, %v847
    %v850 = vpop.permute.xlu0 %849
    %vm851 = vcmp.eq.s32.totalorder %v850, 1
    %v852 = vsel %vm851, %v846, %v653
    %v853 = vpack.c.bf16 %v852, %v852
    %855 = vrot.lane.b32.xlu0 %v853, 64
    %v856 = vpop.permute.xlu0 %855
    %v858 = vsel %vm306, %v856, 0
    %860 = vmatprep.subr.bf16.mxu0 0
    %861 = vmatpush1.bf16.msra.mxu0 0
    %862 = vmatprep.subr.bf16.mxu0 0
    %863 = vmatpush1.bf16.msra.mxu0 0
    %864 = vmatprep.subr.bf16.mxu0 0
    %865 = vmatpush1.bf16.msra.mxu0 0
    %866 = vmatprep.subr.bf16.mxu0 0
    %867 = vmatpush1.bf16.msra.mxu0 0
    %868 = vmatprep.subr.bf16.mxu0 0
    %869 = vmatpush1.bf16.msra.mxu0 0
    %870 = vmatprep.subr.bf16.mxu0 0
    %871 = vmatpush1.bf16.msra.mxu0 0
    %872 = vmatprep.subr.bf16.mxu0 0
    %873 = vmatpush1.bf16.msra.mxu0 %v258
    %874 = vmatprep.subr.bf16.mxu0 0
    %875 = vmatpush1.bf16.msra.mxu0 %v257
    %876 = vmatprep.subr.bf16.mxu0 0
    %877 = vmatpush2.bf16.msra.mxu0 0
    %878 = vmatprep.subr.bf16.mxu0 0
    %879 = vmatpush2.bf16.msra.mxu0 0
    %880 = vmatprep.subr.bf16.mxu0 0
    %881 = vmatpush2.bf16.msra.mxu0 0
    %882 = vmatprep.subr.bf16.mxu0 0
    %883 = vmatpush2.bf16.msra.mxu0 0
    %884 = vmatprep.subr.bf16.mxu0 0
    %885 = vmatpush2.bf16.msra.mxu0 0
    %886 = vmatprep.subr.bf16.mxu0 0
    %887 = vmatpush2.bf16.msra.mxu0 0
    %888 = vmatprep.subr.bf16.mxu0 0
    %889 = vmatpush2.bf16.msra.mxu0 0
    %890 = vmatprep.subr.bf16.mxu0 0
    %891 = vmatpush2.bf16.msra.mxu0 0
    %892 = vmatprep.mubr.bf16.mxu0 0
    %893 = vmatmul.mubr.bf16.gmra.mxu0 %v858
    %v894 = vpop.f32.mrf.mxu0
    %v895 = vadd.f32 %v278, %v894
    %v896 = vpop.f32.mrf.mxu0
    %v897 = vpop.f32.mrf.mxu0
    %v898 = vpop.f32.mrf.mxu0
    %899 = vdwg.mxu0
    %v900 = vpack.c.bf16 %v777, %v777
    %902 = vrot.lane.b32.xlu0 %v900, 64
    %v903 = vpop.permute.xlu0 %902
    %v905 = vsel %vm306, %v903, 0
    %907 = vmatprep.subr.bf16.mxu0 0
    %908 = vmatpush1.bf16.msra.mxu0 0
    %909 = vmatprep.subr.bf16.mxu0 0
    %910 = vmatpush1.bf16.msra.mxu0 0
    %911 = vmatprep.subr.bf16.mxu0 0
    %912 = vmatpush1.bf16.msra.mxu0 0
    %913 = vmatprep.subr.bf16.mxu0 0
    %914 = vmatpush1.bf16.msra.mxu0 0
    %915 = vmatprep.subr.bf16.mxu0 0
    %916 = vmatpush1.bf16.msra.mxu0 0
    %917 = vmatprep.subr.bf16.mxu0 0
    %918 = vmatpush1.bf16.msra.mxu0 0
    %919 = vmatprep.subr.bf16.mxu0 0
    %920 = vmatpush1.bf16.msra.mxu0 %v271
    %921 = vmatprep.subr.bf16.mxu0 0
    %922 = vmatpush1.bf16.msra.mxu0 %v270
    %923 = vmatprep.subr.bf16.mxu0 0
    %924 = vmatpush2.bf16.msra.mxu0 0
    %925 = vmatprep.subr.bf16.mxu0 0
    %926 = vmatpush2.bf16.msra.mxu0 0
    %927 = vmatprep.subr.bf16.mxu0 0
    %928 = vmatpush2.bf16.msra.mxu0 0
    %929 = vmatprep.subr.bf16.mxu0 0
    %930 = vmatpush2.bf16.msra.mxu0 0
    %931 = vmatprep.subr.bf16.mxu0 0
    %932 = vmatpush2.bf16.msra.mxu0 0
    %933 = vmatprep.subr.bf16.mxu0 0
    %934 = vmatpush2.bf16.msra.mxu0 0
    %935 = vmatprep.subr.bf16.mxu0 0
    %936 = vmatpush2.bf16.msra.mxu0 0
    %937 = vmatprep.subr.bf16.mxu0 0
    %938 = vmatpush2.bf16.msra.mxu0 0
    %939 = vmatprep.mubr.bf16.mxu0 0
    %940 = vmatmul.mubr.bf16.gmra.mxu0 %v905
    %v941 = vpop.f32.mrf.mxu0
    %v942 = vadd.f32 %v293, %v941
    %v943 = vpop.f32.mrf.mxu0
    %v944 = vpop.f32.mrf.mxu0
    %v945 = vpop.f32.mrf.mxu0
    %946 = vdwg.mxu0
    %v947 = vadd.f32 %v895, %v942
    %v948 = vxor.u32 %v947, 2147483648
    %v949 = vmul.f32 %v948, 1.442695
    %v950 = vpow.pop %v949
    %v951 = vadd.f32 %v950, 1.0
    %v952 = vrcp.pop %v951
    %v953 = vmul.f32 1.0, %v952
    %955 = vrot.lane.b32.xlu0 %v942, 64
    %v956 = vpop.permute.xlu0 %955
    %v958 = vmul.f32 %v953, %v956
    %960 = vrot.lane.b32.xlu0 %v958, 64
    %v961 = vpop.permute.xlu0 %960
    %v963 = vadd.f32 %v895, %v961
    %v964 = vtanh.pop %v963
    %v965 = vsub.f32 %v777, %v964
    %967 = vrot.lane.b32.xlu0 %v965, 96
    %v968 = vpop.permute.xlu0 %967
    %v970 = vmul.f32 %v953, %v968
    %972 = vrot.lane.b32.xlu0 %v970, 32
    %v973 = vpop.permute.xlu0 %972
    %v975 = vadd.f32 %v964, %v973
    %v976 = vsel %vm851, %v975, %v777
    %977 = vmatprep.subr.bf16.mxu0 0
    %978 = vmatpush1.bf16.msra.mxu0 0
    %979 = vmatprep.subr.bf16.mxu0 0
    %980 = vmatpush1.bf16.msra.mxu0 0
    %981 = vmatprep.subr.bf16.mxu0 0
    %982 = vmatpush1.bf16.msra.mxu0 0
    %983 = vmatprep.subr.bf16.mxu0 0
    %984 = vmatpush1.bf16.msra.mxu0 0
    %985 = vmatprep.subr.bf16.mxu0 0
    %986 = vmatpush1.bf16.msra.mxu0 0
    %987 = vmatprep.subr.bf16.mxu0 0
    %988 = vmatpush1.bf16.msra.mxu0 0
    %989 = vmatprep.subr.bf16.mxu0 0
    %990 = vmatpush1.bf16.msra.mxu0 %v264
    %991 = vmatprep.subr.bf16.mxu0 0
    %992 = vmatpush1.bf16.msra.mxu0 %v263
    %993 = vmatprep.subr.bf16.mxu0 0
    %994 = vmatpush2.bf16.msra.mxu0 0
    %995 = vmatprep.subr.bf16.mxu0 0
    %996 = vmatpush2.bf16.msra.mxu0 0
    %997 = vmatprep.subr.bf16.mxu0 0
    %998 = vmatpush2.bf16.msra.mxu0 0
    %999 = vmatprep.subr.bf16.mxu0 0
    %1000 = vmatpush2.bf16.msra.mxu0 0
    %1001 = vmatprep.subr.bf16.mxu0 0
    %1002 = vmatpush2.bf16.msra.mxu0 0
    %1003 = vmatprep.subr.bf16.mxu0 0
    %1004 = vmatpush2.bf16.msra.mxu0 0
    %1005 = vmatprep.subr.bf16.mxu0 0
    %1006 = vmatpush2.bf16.msra.mxu0 0
    %1007 = vmatprep.subr.bf16.mxu0 0
    %1008 = vmatpush2.bf16.msra.mxu0 0
    %1009 = vmatprep.mubr.bf16.mxu0 0
    %1010 = vmatmul.mubr.bf16.gmra.mxu0 %v858
    %v1011 = vpop.f32.mrf.mxu0
    %v1012 = vadd.f32 %v285, %v1011
    %v1013 = vpop.f32.mrf.mxu0
    %v1014 = vpop.f32.mrf.mxu0
    %v1015 = vpop.f32.mrf.mxu0
    %1016 = vdwg.mxu0
    %v1017 = vadd.f32 %v365, %v1012
    %v1018 = vxor.u32 %v1017, 2147483648
    %v1019 = vmul.f32 %v1018, 1.442695
    %v1020 = vpow.pop %v1019
    %v1021 = vadd.f32 %v1020, 1.0
    %v1022 = vrcp.pop %v1021
    %v1023 = vmul.f32 1.0, %v1022
    %1025 = vrot.lane.b32.xlu0 %v1012, 64
    %v1026 = vpop.permute.xlu0 %1025
    %v1028 = vmul.f32 %v1023, %v1026
    %1030 = vrot.lane.b32.xlu0 %v1028, 64
    %v1031 = vpop.permute.xlu0 %1030
    %v1033 = vadd.f32 %v365, %v1031
    %v1034 = vtanh.pop %v1033
    %v1035 = vsub.f32 %v852, %v1034
    %1037 = vrot.lane.b32.xlu0 %v1035, 96
    %v1038 = vpop.permute.xlu0 %1037
    %v1040 = vmul.f32 %v1023, %v1038
    %1042 = vrot.lane.b32.xlu0 %v1040, 32
    %v1043 = vpop.permute.xlu0 %1042
    %v1045 = vadd.f32 %v1034, %v1043
    %v1046 = vsel %vm241, 1, 0
    %1047 = vset.pattern.permute.xlu0 0
    %1048 = vperm.xlu0 %1047, %v1046
    %v1049 = vpop.permute.xlu0 %1048
    %vm1050 = vcmp.eq.s32.totalorder %v1049, 1
    %v1051 = vsel %vm1050, %v1045, %v852
    %v1052 = vpack.c.bf16 %v1051, %v1051
    %1054 = vrot.lane.b32.xlu0 %v1052, 64
    %v1055 = vpop.permute.xlu0 %1054
    %v1057 = vsel %vm306, %v1055, 0
    %1059 = vmatprep.subr.bf16.mxu0 0
    %1060 = vmatpush1.bf16.msra.mxu0 0
    %1061 = vmatprep.subr.bf16.mxu0 0
    %1062 = vmatpush1.bf16.msra.mxu0 0
    %1063 = vmatprep.subr.bf16.mxu0 0
    %1064 = vmatpush1.bf16.msra.mxu0 0
    %1065 = vmatprep.subr.bf16.mxu0 0
    %1066 = vmatpush1.bf16.msra.mxu0 0
    %1067 = vmatprep.subr.bf16.mxu0 0
    %1068 = vmatpush1.bf16.msra.mxu0 0
    %1069 = vmatprep.subr.bf16.mxu0 0
    %1070 = vmatpush1.bf16.msra.mxu0 0
    %1071 = vmatprep.subr.bf16.mxu0 0
    %1072 = vmatpush1.bf16.msra.mxu0 %v258
    %1073 = vmatprep.subr.bf16.mxu0 0
    %1074 = vmatpush1.bf16.msra.mxu0 %v257
    %1075 = vmatprep.subr.bf16.mxu0 0
    %1076 = vmatpush2.bf16.msra.mxu0 0
    %1077 = vmatprep.subr.bf16.mxu0 0
    %1078 = vmatpush2.bf16.msra.mxu0 0
    %1079 = vmatprep.subr.bf16.mxu0 0
    %1080 = vmatpush2.bf16.msra.mxu0 0
    %1081 = vmatprep.subr.bf16.mxu0 0
    %1082 = vmatpush2.bf16.msra.mxu0 0
    %1083 = vmatprep.subr.bf16.mxu0 0
    %1084 = vmatpush2.bf16.msra.mxu0 0
    %1085 = vmatprep.subr.bf16.mxu0 0
    %1086 = vmatpush2.bf16.msra.mxu0 0
    %1087 = vmatprep.subr.bf16.mxu0 0
    %1088 = vmatpush2.bf16.msra.mxu0 0
    %1089 = vmatprep.subr.bf16.mxu0 0
    %1090 = vmatpush2.bf16.msra.mxu0 0
    %1091 = vmatprep.mubr.bf16.mxu0 0
    %1092 = vmatmul.mubr.bf16.gmra.mxu0 %v1057
    %v1093 = vpop.f32.mrf.mxu0
    %v1094 = vadd.f32 %v278, %v1093
    %v1095 = vpop.f32.mrf.mxu0
    %v1096 = vpop.f32.mrf.mxu0
    %v1097 = vpop.f32.mrf.mxu0
    %1098 = vdwg.mxu0
    %v1099 = vpack.c.bf16 %v976, %v976
    %1101 = vrot.lane.b32.xlu0 %v1099, 64
    %v1102 = vpop.permute.xlu0 %1101
    %v1104 = vsel %vm306, %v1102, 0
    %1106 = vmatprep.subr.bf16.mxu0 0
    %1107 = vmatpush1.bf16.msra.mxu0 0
    %1108 = vmatprep.subr.bf16.mxu0 0
    %1109 = vmatpush1.bf16.msra.mxu0 0
    %1110 = vmatprep.subr.bf16.mxu0 0
    %1111 = vmatpush1.bf16.msra.mxu0 0
    %1112 = vmatprep.subr.bf16.mxu0 0
    %1113 = vmatpush1.bf16.msra.mxu0 0
    %1114 = vmatprep.subr.bf16.mxu0 0
    %1115 = vmatpush1.bf16.msra.mxu0 0
    %1116 = vmatprep.subr.bf16.mxu0 0
    %1117 = vmatpush1.bf16.msra.mxu0 0
    %1118 = vmatprep.subr.bf16.mxu0 0
    %1119 = vmatpush1.bf16.msra.mxu0 %v271
    %1120 = vmatprep.subr.bf16.mxu0 0
    %1121 = vmatpush1.bf16.msra.mxu0 %v270
    %1122 = vmatprep.subr.bf16.mxu0 0
    %1123 = vmatpush2.bf16.msra.mxu0 0
    %1124 = vmatprep.subr.bf16.mxu0 0
    %1125 = vmatpush2.bf16.msra.mxu0 0
    %1126 = vmatprep.subr.bf16.mxu0 0
    %1127 = vmatpush2.bf16.msra.mxu0 0
    %1128 = vmatprep.subr.bf16.mxu0 0
    %1129 = vmatpush2.bf16.msra.mxu0 0
    %1130 = vmatprep.subr.bf16.mxu0 0
    %1131 = vmatpush2.bf16.msra.mxu0 0
    %1132 = vmatprep.subr.bf16.mxu0 0
    %1133 = vmatpush2.bf16.msra.mxu0 0
    %1134 = vmatprep.subr.bf16.mxu0 0
    %1135 = vmatpush2.bf16.msra.mxu0 0
    %1136 = vmatprep.subr.bf16.mxu0 0
    %1137 = vmatpush2.bf16.msra.mxu0 0
    %1138 = vmatprep.mubr.bf16.mxu0 0
    %1139 = vmatmul.mubr.bf16.gmra.mxu0 %v1104
    %v1140 = vpop.f32.mrf.mxu0
    %v1141 = vadd.f32 %v293, %v1140
    %v1142 = vpop.f32.mrf.mxu0
    %v1143 = vpop.f32.mrf.mxu0
    %v1144 = vpop.f32.mrf.mxu0
    %1145 = vdwg.mxu0
    %v1146 = vadd.f32 %v1094, %v1141
    %v1147 = vxor.u32 %v1146, 2147483648
    %v1148 = vmul.f32 %v1147, 1.442695
    %v1149 = vpow.pop %v1148
    %v1150 = vadd.f32 %v1149, 1.0
    %v1151 = vrcp.pop %v1150
    %v1152 = vmul.f32 1.0, %v1151
    %1154 = vrot.lane.b32.xlu0 %v1141, 64
    %v1155 = vpop.permute.xlu0 %1154
    %v1157 = vmul.f32 %v1152, %v1155
    %1159 = vrot.lane.b32.xlu0 %v1157, 64
    %v1160 = vpop.permute.xlu0 %1159
    %v1162 = vadd.f32 %v1094, %v1160
    %v1163 = vtanh.pop %v1162
    %v1164 = vsub.f32 %v976, %v1163
    %1166 = vrot.lane.b32.xlu0 %v1164, 96
    %v1167 = vpop.permute.xlu0 %1166
    %v1169 = vmul.f32 %v1152, %v1167
    %1171 = vrot.lane.b32.xlu0 %v1169, 32
    %v1172 = vpop.permute.xlu0 %1171
    %v1174 = vadd.f32 %v1163, %v1172
    %v1175 = vsel %vm1050, %v1174, %v976
    %1176 = vmatprep.subr.bf16.mxu0 0
    %1177 = vmatpush1.bf16.msra.mxu0 0
    %1178 = vmatprep.subr.bf16.mxu0 0
    %1179 = vmatpush1.bf16.msra.mxu0 0
    %1180 = vmatprep.subr.bf16.mxu0 0
    %1181 = vmatpush1.bf16.msra.mxu0 0
    %1182 = vmatprep.subr.bf16.mxu0 0
    %1183 = vmatpush1.bf16.msra.mxu0 0
    %1184 = vmatprep.subr.bf16.mxu0 0
    %1185 = vmatpush1.bf16.msra.mxu0 0
    %1186 = vmatprep.subr.bf16.mxu0 0
    %1187 = vmatpush1.bf16.msra.mxu0 0
    %1188 = vmatprep.subr.bf16.mxu0 0
    %1189 = vmatpush1.bf16.msra.mxu0 %v264
    %1190 = vmatprep.subr.bf16.mxu0 0
    %1191 = vmatpush1.bf16.msra.mxu0 %v263
    %1192 = vmatprep.subr.bf16.mxu0 0
    %1193 = vmatpush2.bf16.msra.mxu0 0
    %1194 = vmatprep.subr.bf16.mxu0 0
    %1195 = vmatpush2.bf16.msra.mxu0 0
    %1196 = vmatprep.subr.bf16.mxu0 0
    %1197 = vmatpush2.bf16.msra.mxu0 0
    %1198 = vmatprep.subr.bf16.mxu0 0
    %1199 = vmatpush2.bf16.msra.mxu0 0
    %1200 = vmatprep.subr.bf16.mxu0 0
    %1201 = vmatpush2.bf16.msra.mxu0 0
    %1202 = vmatprep.subr.bf16.mxu0 0
    %1203 = vmatpush2.bf16.msra.mxu0 0
    %1204 = vmatprep.subr.bf16.mxu0 0
    %1205 = vmatpush2.bf16.msra.mxu0 0
    %1206 = vmatprep.subr.bf16.mxu0 0
    %1207 = vmatpush2.bf16.msra.mxu0 0
    %1208 = vmatprep.mubr.bf16.mxu0 0
    %1209 = vmatmul.mubr.bf16.gmra.mxu0 %v1057
    %v1210 = vpop.f32.mrf.mxu0
    %v1211 = vadd.f32 %v285, %v1210
    %v1212 = vpop.f32.mrf.mxu0
    %v1213 = vpop.f32.mrf.mxu0
    %v1214 = vpop.f32.mrf.mxu0
    %1215 = vdwg.mxu0
    %v1216 = vadd.f32 %v370, %v1211
    %v1217 = vxor.u32 %v1216, 2147483648
    %v1218 = vmul.f32 %v1217, 1.442695
    %v1219 = vpow.pop %v1218
    %v1220 = vadd.f32 %v1219, 1.0
    %v1221 = vrcp.pop %v1220
    %v1222 = vmul.f32 1.0, %v1221
    %1224 = vrot.lane.b32.xlu0 %v1211, 64
    %v1225 = vpop.permute.xlu0 %1224
    %v1227 = vmul.f32 %v1222, %v1225
    %1229 = vrot.lane.b32.xlu0 %v1227, 64
    %v1230 = vpop.permute.xlu0 %1229
    %v1232 = vadd.f32 %v370, %v1230
    %v1233 = vtanh.pop %v1232
    %v1234 = vsub.f32 %v1051, %v1233
    %1236 = vrot.lane.b32.xlu0 %v1234, 96
    %v1237 = vpop.permute.xlu0 %1236
    %v1239 = vmul.f32 %v1222, %v1237
    %1241 = vrot.lane.b32.xlu0 %v1239, 32
    %v1242 = vpop.permute.xlu0 %1241
    %v1244 = vadd.f32 %v1233, %v1242
    %v1245 = vsel %vm242, 1, 0
    %1246 = vset.pattern.permute.xlu0 0
    %1247 = vperm.xlu0 %1246, %v1245
    %v1248 = vpop.permute.xlu0 %1247
    %vm1249 = vcmp.eq.s32.totalorder %v1248, 1
    %v1250 = vsel %vm1249, %v1244, %v1051
    %v1251 = vpack.c.bf16 %v1250, %v1250
    %1253 = vrot.lane.b32.xlu0 %v1251, 64
    %v1254 = vpop.permute.xlu0 %1253
    %v1256 = vsel %vm306, %v1254, 0
    %1258 = vmatprep.subr.bf16.mxu0 0
    %1259 = vmatpush1.bf16.msra.mxu0 0
    %1260 = vmatprep.subr.bf16.mxu0 0
    %1261 = vmatpush1.bf16.msra.mxu0 0
    %1262 = vmatprep.subr.bf16.mxu0 0
    %1263 = vmatpush1.bf16.msra.mxu0 0
    %1264 = vmatprep.subr.bf16.mxu0 0
    %1265 = vmatpush1.bf16.msra.mxu0 0
    %1266 = vmatprep.subr.bf16.mxu0 0
    %1267 = vmatpush1.bf16.msra.mxu0 0
    %1268 = vmatprep.subr.bf16.mxu0 0
    %1269 = vmatpush1.bf16.msra.mxu0 0
    %1270 = vmatprep.subr.bf16.mxu0 0
    %1271 = vmatpush1.bf16.msra.mxu0 %v258
    %1272 = vmatprep.subr.bf16.mxu0 0
    %1273 = vmatpush1.bf16.msra.mxu0 %v257
    %1274 = vmatprep.subr.bf16.mxu0 0
    %1275 = vmatpush2.bf16.msra.mxu0 0
    %1276 = vmatprep.subr.bf16.mxu0 0
    %1277 = vmatpush2.bf16.msra.mxu0 0
    %1278 = vmatprep.subr.bf16.mxu0 0
    %1279 = vmatpush2.bf16.msra.mxu0 0
    %1280 = vmatprep.subr.bf16.mxu0 0
    %1281 = vmatpush2.bf16.msra.mxu0 0
    %1282 = vmatprep.subr.bf16.mxu0 0
    %1283 = vmatpush2.bf16.msra.mxu0 0
    %1284 = vmatprep.subr.bf16.mxu0 0
    %1285 = vmatpush2.bf16.msra.mxu0 0
    %1286 = vmatprep.subr.bf16.mxu0 0
    %1287 = vmatpush2.bf16.msra.mxu0 0
    %1288 = vmatprep.subr.bf16.mxu0 0
    %1289 = vmatpush2.bf16.msra.mxu0 0
    %1290 = vmatprep.mubr.bf16.mxu0 0
    %1291 = vmatmul.mubr.bf16.gmra.mxu0 %v1256
    %v1292 = vpop.f32.mrf.mxu0
    %v1293 = vadd.f32 %v278, %v1292
    %v1294 = vpop.f32.mrf.mxu0
    %v1295 = vpop.f32.mrf.mxu0
    %v1296 = vpop.f32.mrf.mxu0
    %1297 = vdwg.mxu0
    %v1298 = vpack.c.bf16 %v1175, %v1175
    %1300 = vrot.lane.b32.xlu0 %v1298, 64
    %v1301 = vpop.permute.xlu0 %1300
    %v1303 = vsel %vm306, %v1301, 0
    %1305 = vmatprep.subr.bf16.mxu0 0
    %1306 = vmatpush1.bf16.msra.mxu0 0
    %1307 = vmatprep.subr.bf16.mxu0 0
    %1308 = vmatpush1.bf16.msra.mxu0 0
    %1309 = vmatprep.subr.bf16.mxu0 0
    %1310 = vmatpush1.bf16.msra.mxu0 0
    %1311 = vmatprep.subr.bf16.mxu0 0
    %1312 = vmatpush1.bf16.msra.mxu0 0
    %1313 = vmatprep.subr.bf16.mxu0 0
    %1314 = vmatpush1.bf16.msra.mxu0 0
    %1315 = vmatprep.subr.bf16.mxu0 0
    %1316 = vmatpush1.bf16.msra.mxu0 0
    %1317 = vmatprep.subr.bf16.mxu0 0
    %1318 = vmatpush1.bf16.msra.mxu0 %v271
    %1319 = vmatprep.subr.bf16.mxu0 0
    %1320 = vmatpush1.bf16.msra.mxu0 %v270
    %1321 = vmatprep.subr.bf16.mxu0 0
    %1322 = vmatpush2.bf16.msra.mxu0 0
    %1323 = vmatprep.subr.bf16.mxu0 0
    %1324 = vmatpush2.bf16.msra.mxu0 0
    %1325 = vmatprep.subr.bf16.mxu0 0
    %1326 = vmatpush2.bf16.msra.mxu0 0
    %1327 = vmatprep.subr.bf16.mxu0 0
    %1328 = vmatpush2.bf16.msra.mxu0 0
    %1329 = vmatprep.subr.bf16.mxu0 0
    %1330 = vmatpush2.bf16.msra.mxu0 0
    %1331 = vmatprep.subr.bf16.mxu0 0
    %1332 = vmatpush2.bf16.msra.mxu0 0
    %1333 = vmatprep.subr.bf16.mxu0 0
    %1334 = vmatpush2.bf16.msra.mxu0 0
    %1335 = vmatprep.subr.bf16.mxu0 0
    %1336 = vmatpush2.bf16.msra.mxu0 0
    %1337 = vmatprep.mubr.bf16.mxu0 0
    %1338 = vmatmul.mubr.bf16.gmra.mxu0 %v1303
    %v1339 = vpop.f32.mrf.mxu0
    %v1340 = vadd.f32 %v293, %v1339
    %v1341 = vpop.f32.mrf.mxu0
    %v1342 = vpop.f32.mrf.mxu0
    %v1343 = vpop.f32.mrf.mxu0
    %1344 = vdwg.mxu0
    %v1345 = vadd.f32 %v1293, %v1340
    %v1346 = vxor.u32 %v1345, 2147483648
    %v1347 = vmul.f32 %v1346, 1.442695
    %v1348 = vpow.pop %v1347
    %v1349 = vadd.f32 %v1348, 1.0
    %v1350 = vrcp.pop %v1349
    %v1351 = vmul.f32 1.0, %v1350
    %1353 = vrot.lane.b32.xlu0 %v1340, 64
    %v1354 = vpop.permute.xlu0 %1353
    %v1356 = vmul.f32 %v1351, %v1354
    %1358 = vrot.lane.b32.xlu0 %v1356, 64
    %v1359 = vpop.permute.xlu0 %1358
    %v1361 = vadd.f32 %v1293, %v1359
    %v1362 = vtanh.pop %v1361
    %v1363 = vsub.f32 %v1175, %v1362
    %1365 = vrot.lane.b32.xlu0 %v1363, 96
    %v1366 = vpop.permute.xlu0 %1365
    %v1368 = vmul.f32 %v1351, %v1366
    %1370 = vrot.lane.b32.xlu0 %v1368, 32
    %v1371 = vpop.permute.xlu0 %1370
    %v1373 = vadd.f32 %v1362, %v1371
    %v1374 = vsel %vm1249, %v1373, %v1175
    %1375 = vmatprep.subr.bf16.mxu0 0
    %1376 = vmatpush1.bf16.msra.mxu0 0
    %1377 = vmatprep.subr.bf16.mxu0 0
    %1378 = vmatpush1.bf16.msra.mxu0 0
    %1379 = vmatprep.subr.bf16.mxu0 0
    %1380 = vmatpush1.bf16.msra.mxu0 0
    %1381 = vmatprep.subr.bf16.mxu0 0
    %1382 = vmatpush1.bf16.msra.mxu0 0
    %1383 = vmatprep.subr.bf16.mxu0 0
    %1384 = vmatpush1.bf16.msra.mxu0 0
    %1385 = vmatprep.subr.bf16.mxu0 0
    %1386 = vmatpush1.bf16.msra.mxu0 0
    %1387 = vmatprep.subr.bf16.mxu0 0
    %1388 = vmatpush1.bf16.msra.mxu0 %v264
    %1389 = vmatprep.subr.bf16.mxu0 0
    %1390 = vmatpush1.bf16.msra.mxu0 %v263
    %1391 = vmatprep.subr.bf16.mxu0 0
    %1392 = vmatpush2.bf16.msra.mxu0 0
    %1393 = vmatprep.subr.bf16.mxu0 0
    %1394 = vmatpush2.bf16.msra.mxu0 0
    %1395 = vmatprep.subr.bf16.mxu0 0
    %1396 = vmatpush2.bf16.msra.mxu0 0
    %1397 = vmatprep.subr.bf16.mxu0 0
    %1398 = vmatpush2.bf16.msra.mxu0 0
    %1399 = vmatprep.subr.bf16.mxu0 0
    %1400 = vmatpush2.bf16.msra.mxu0 0
    %1401 = vmatprep.subr.bf16.mxu0 0
    %1402 = vmatpush2.bf16.msra.mxu0 0
    %1403 = vmatprep.subr.bf16.mxu0 0
    %1404 = vmatpush2.bf16.msra.mxu0 0
    %1405 = vmatprep.subr.bf16.mxu0 0
    %1406 = vmatpush2.bf16.msra.mxu0 0
    %1407 = vmatprep.mubr.bf16.mxu0 0
    %1408 = vmatmul.mubr.bf16.gmra.mxu0 %v1256
    %v1409 = vpop.f32.mrf.mxu0
    %v1410 = vadd.f32 %v285, %v1409
    %v1411 = vpop.f32.mrf.mxu0
    %v1412 = vpop.f32.mrf.mxu0
    %v1413 = vpop.f32.mrf.mxu0
    %1414 = vdwg.mxu0
    %v1415 = vadd.f32 %v373, %v1410
    %v1416 = vxor.u32 %v1415, 2147483648
    %v1417 = vmul.f32 %v1416, 1.442695
    %v1418 = vpow.pop %v1417
    %v1419 = vadd.f32 %v1418, 1.0
    %v1420 = vrcp.pop %v1419
    %v1421 = vmul.f32 1.0, %v1420
    %1423 = vrot.lane.b32.xlu0 %v1410, 64
    %v1424 = vpop.permute.xlu0 %1423
    %v1426 = vmul.f32 %v1421, %v1424
    %1428 = vrot.lane.b32.xlu0 %v1426, 64
    %v1429 = vpop.permute.xlu0 %1428
    %v1431 = vadd.f32 %v373, %v1429
    %v1432 = vtanh.pop %v1431
    %v1433 = vsub.f32 %v1250, %v1432
    %1435 = vrot.lane.b32.xlu0 %v1433, 96
    %v1436 = vpop.permute.xlu0 %1435
    %v1438 = vmul.f32 %v1421, %v1436
    %1440 = vrot.lane.b32.xlu0 %v1438, 32
    %v1441 = vpop.permute.xlu0 %1440
    %v1443 = vadd.f32 %v1432, %v1441
    %v1444 = vsel %vm243, 1, 0
    %1445 = vset.pattern.permute.xlu0 0
    %1446 = vperm.xlu0 %1445, %v1444
    %v1447 = vpop.permute.xlu0 %1446
    %vm1448 = vcmp.eq.s32.totalorder %v1447, 1
    %v1449 = vsel %vm1448, %v1443, %v1250
    %v1450 = vpack.c.bf16 %v1449, %v1449
    %1452 = vrot.lane.b32.xlu0 %v1450, 64
    %v1453 = vpop.permute.xlu0 %1452
    %v1455 = vsel %vm306, %v1453, 0
    %1457 = vmatprep.subr.bf16.mxu0 0
    %1458 = vmatpush1.bf16.msra.mxu0 0
    %1459 = vmatprep.subr.bf16.mxu0 0
    %1460 = vmatpush1.bf16.msra.mxu0 0
    %1461 = vmatprep.subr.bf16.mxu0 0
    %1462 = vmatpush1.bf16.msra.mxu0 0
    %1463 = vmatprep.subr.bf16.mxu0 0
    %1464 = vmatpush1.bf16.msra.mxu0 0
    %1465 = vmatprep.subr.bf16.mxu0 0
    %1466 = vmatpush1.bf16.msra.mxu0 0
    %1467 = vmatprep.subr.bf16.mxu0 0
    %1468 = vmatpush1.bf16.msra.mxu0 0
    %1469 = vmatprep.subr.bf16.mxu0 0
    %1470 = vmatpush1.bf16.msra.mxu0 %v258
    %1471 = vmatprep.subr.bf16.mxu0 0
    %1472 = vmatpush1.bf16.msra.mxu0 %v257
    %1473 = vmatprep.subr.bf16.mxu0 0
    %1474 = vmatpush2.bf16.msra.mxu0 0
    %1475 = vmatprep.subr.bf16.mxu0 0
    %1476 = vmatpush2.bf16.msra.mxu0 0
    %1477 = vmatprep.subr.bf16.mxu0 0
    %1478 = vmatpush2.bf16.msra.mxu0 0
    %1479 = vmatprep.subr.bf16.mxu0 0
    %1480 = vmatpush2.bf16.msra.mxu0 0
    %1481 = vmatprep.subr.bf16.mxu0 0
    %1482 = vmatpush2.bf16.msra.mxu0 0
    %1483 = vmatprep.subr.bf16.mxu0 0
    %1484 = vmatpush2.bf16.msra.mxu0 0
    %1485 = vmatprep.subr.bf16.mxu0 0
    %1486 = vmatpush2.bf16.msra.mxu0 0
    %1487 = vmatprep.subr.bf16.mxu0 0
    %1488 = vmatpush2.bf16.msra.mxu0 0
    %1489 = vmatprep.mubr.bf16.mxu0 0
    %1490 = vmatmul.mubr.bf16.gmra.mxu0 %v1455
    %v1491 = vpop.f32.mrf.mxu0
    %v1492 = vadd.f32 %v278, %v1491
    %v1493 = vpop.f32.mrf.mxu0
    %v1494 = vpop.f32.mrf.mxu0
    %v1495 = vpop.f32.mrf.mxu0
    %1496 = vdwg.mxu0
    %v1497 = vpack.c.bf16 %v1374, %v1374
    %1499 = vrot.lane.b32.xlu0 %v1497, 64
    %v1500 = vpop.permute.xlu0 %1499
    %v1502 = vsel %vm306, %v1500, 0
    %1504 = vmatprep.subr.bf16.mxu0 0
    %1505 = vmatpush1.bf16.msra.mxu0 0
    %1506 = vmatprep.subr.bf16.mxu0 0
    %1507 = vmatpush1.bf16.msra.mxu0 0
    %1508 = vmatprep.subr.bf16.mxu0 0
    %1509 = vmatpush1.bf16.msra.mxu0 0
    %1510 = vmatprep.subr.bf16.mxu0 0
    %1511 = vmatpush1.bf16.msra.mxu0 0
    %1512 = vmatprep.subr.bf16.mxu0 0
    %1513 = vmatpush1.bf16.msra.mxu0 0
    %1514 = vmatprep.subr.bf16.mxu0 0
    %1515 = vmatpush1.bf16.msra.mxu0 0
    %1516 = vmatprep.subr.bf16.mxu0 0
    %1517 = vmatpush1.bf16.msra.mxu0 %v271
    %1518 = vmatprep.subr.bf16.mxu0 0
    %1519 = vmatpush1.bf16.msra.mxu0 %v270
    %1520 = vmatprep.subr.bf16.mxu0 0
    %1521 = vmatpush2.bf16.msra.mxu0 0
    %1522 = vmatprep.subr.bf16.mxu0 0
    %1523 = vmatpush2.bf16.msra.mxu0 0
    %1524 = vmatprep.subr.bf16.mxu0 0
    %1525 = vmatpush2.bf16.msra.mxu0 0
    %1526 = vmatprep.subr.bf16.mxu0 0
    %1527 = vmatpush2.bf16.msra.mxu0 0
    %1528 = vmatprep.subr.bf16.mxu0 0
    %1529 = vmatpush2.bf16.msra.mxu0 0
    %1530 = vmatprep.subr.bf16.mxu0 0
    %1531 = vmatpush2.bf16.msra.mxu0 0
    %1532 = vmatprep.subr.bf16.mxu0 0
    %1533 = vmatpush2.bf16.msra.mxu0 0
    %1534 = vmatprep.subr.bf16.mxu0 0
    %1535 = vmatpush2.bf16.msra.mxu0 0
    %1536 = vmatprep.mubr.bf16.mxu0 0
    %1537 = vmatmul.mubr.bf16.gmra.mxu0 %v1502
    %v1538 = vpop.f32.mrf.mxu0
    %v1539 = vadd.f32 %v293, %v1538
    %v1540 = vpop.f32.mrf.mxu0
    %v1541 = vpop.f32.mrf.mxu0
    %v1542 = vpop.f32.mrf.mxu0
    %1543 = vdwg.mxu0
    %v1544 = vadd.f32 %v1492, %v1539
    %v1545 = vxor.u32 %v1544, 2147483648
    %v1546 = vmul.f32 %v1545, 1.442695
    %v1547 = vpow.pop %v1546
    %v1548 = vadd.f32 %v1547, 1.0
    %v1549 = vrcp.pop %v1548
    %v1550 = vmul.f32 1.0, %v1549
    %1552 = vrot.lane.b32.xlu0 %v1539, 64
    %v1553 = vpop.permute.xlu0 %1552
    %v1555 = vmul.f32 %v1550, %v1553
    %1557 = vrot.lane.b32.xlu0 %v1555, 64
    %v1558 = vpop.permute.xlu0 %1557
    %v1560 = vadd.f32 %v1492, %v1558
    %v1561 = vtanh.pop %v1560
    %v1562 = vsub.f32 %v1374, %v1561
    %1564 = vrot.lane.b32.xlu0 %v1562, 96
    %v1565 = vpop.permute.xlu0 %1564
    %v1567 = vmul.f32 %v1550, %v1565
    %1569 = vrot.lane.b32.xlu0 %v1567, 32
    %v1570 = vpop.permute.xlu0 %1569
    %v1572 = vadd.f32 %v1561, %v1570
    %v1573 = vsel %vm1448, %v1572, %v1374
    %1574 = vmatprep.subr.bf16.mxu0 0
    %1575 = vmatpush1.bf16.msra.mxu0 0
    %1576 = vmatprep.subr.bf16.mxu0 0
    %1577 = vmatpush1.bf16.msra.mxu0 0
    %1578 = vmatprep.subr.bf16.mxu0 0
    %1579 = vmatpush1.bf16.msra.mxu0 0
    %1580 = vmatprep.subr.bf16.mxu0 0
    %1581 = vmatpush1.bf16.msra.mxu0 0
    %1582 = vmatprep.subr.bf16.mxu0 0
    %1583 = vmatpush1.bf16.msra.mxu0 0
    %1584 = vmatprep.subr.bf16.mxu0 0
    %1585 = vmatpush1.bf16.msra.mxu0 0
    %1586 = vmatprep.subr.bf16.mxu0 0
    %1587 = vmatpush1.bf16.msra.mxu0 %v264
    %1588 = vmatprep.subr.bf16.mxu0 0
    %1589 = vmatpush1.bf16.msra.mxu0 %v263
    %1590 = vmatprep.subr.bf16.mxu0 0
    %1591 = vmatpush2.bf16.msra.mxu0 0
    %1592 = vmatprep.subr.bf16.mxu0 0
    %1593 = vmatpush2.bf16.msra.mxu0 0
    %1594 = vmatprep.subr.bf16.mxu0 0
    %1595 = vmatpush2.bf16.msra.mxu0 0
    %1596 = vmatprep.subr.bf16.mxu0 0
    %1597 = vmatpush2.bf16.msra.mxu0 0
    %1598 = vmatprep.subr.bf16.mxu0 0
    %1599 = vmatpush2.bf16.msra.mxu0 0
    %1600 = vmatprep.subr.bf16.mxu0 0
    %1601 = vmatpush2.bf16.msra.mxu0 0
    %1602 = vmatprep.subr.bf16.mxu0 0
    %1603 = vmatpush2.bf16.msra.mxu0 0
    %1604 = vmatprep.subr.bf16.mxu0 0
    %1605 = vmatpush2.bf16.msra.mxu0 0
    %1606 = vmatprep.mubr.bf16.mxu0 0
    %1607 = vmatmul.mubr.bf16.gmra.mxu0 %v1455
    %v1608 = vpop.f32.mrf.mxu0
    %v1609 = vadd.f32 %v285, %v1608
    %v1610 = vpop.f32.mrf.mxu0
    %v1611 = vpop.f32.mrf.mxu0
    %v1612 = vpop.f32.mrf.mxu0
    %1613 = vdwg.mxu0
    %v1614 = vadd.f32 %v378, %v1609
    %v1615 = vxor.u32 %v1614, 2147483648
    %v1616 = vmul.f32 %v1615, 1.442695
    %v1617 = vpow.pop %v1616
    %v1618 = vadd.f32 %v1617, 1.0
    %v1619 = vrcp.pop %v1618
    %v1620 = vmul.f32 1.0, %v1619
    %1622 = vrot.lane.b32.xlu0 %v1609, 64
    %v1623 = vpop.permute.xlu0 %1622
    %v1625 = vmul.f32 %v1620, %v1623
    %1627 = vrot.lane.b32.xlu0 %v1625, 64
    %v1628 = vpop.permute.xlu0 %1627
    %v1630 = vadd.f32 %v378, %v1628
    %v1631 = vtanh.pop %v1630
    %v1632 = vsub.f32 %v1449, %v1631
    %1634 = vrot.lane.b32.xlu0 %v1632, 96
    %v1635 = vpop.permute.xlu0 %1634
    %v1637 = vmul.f32 %v1620, %v1635
    %1639 = vrot.lane.b32.xlu0 %v1637, 32
    %v1640 = vpop.permute.xlu0 %1639
    %v1642 = vadd.f32 %v1631, %v1640
    %v1643 = vsel %vm244, 1, 0
    %1644 = vset.pattern.permute.xlu0 0
    %1645 = vperm.xlu0 %1644, %v1643
    %v1646 = vpop.permute.xlu0 %1645
    %vm1647 = vcmp.eq.s32.totalorder %v1646, 1
    %v1648 = vsel %vm1647, %v1642, %v1449
    %v1649 = vpack.c.bf16 %v1648, %v1648
    %1651 = vrot.lane.b32.xlu0 %v1649, 64
    %v1652 = vpop.permute.xlu0 %1651
    %v1654 = vsel %vm306, %v1652, 0
    %1656 = vmatprep.subr.bf16.mxu0 0
    %1657 = vmatpush1.bf16.msra.mxu0 0
    %1658 = vmatprep.subr.bf16.mxu0 0
    %1659 = vmatpush1.bf16.msra.mxu0 0
    %1660 = vmatprep.subr.bf16.mxu0 0
    %1661 = vmatpush1.bf16.msra.mxu0 0
    %1662 = vmatprep.subr.bf16.mxu0 0
    %1663 = vmatpush1.bf16.msra.mxu0 0
    %1664 = vmatprep.subr.bf16.mxu0 0
    %1665 = vmatpush1.bf16.msra.mxu0 0
    %1666 = vmatprep.subr.bf16.mxu0 0
    %1667 = vmatpush1.bf16.msra.mxu0 0
    %1668 = vmatprep.subr.bf16.mxu0 0
    %1669 = vmatpush1.bf16.msra.mxu0 %v258
    %1670 = vmatprep.subr.bf16.mxu0 0
    %1671 = vmatpush1.bf16.msra.mxu0 %v257
    %1672 = vmatprep.subr.bf16.mxu0 0
    %1673 = vmatpush2.bf16.msra.mxu0 0
    %1674 = vmatprep.subr.bf16.mxu0 0
    %1675 = vmatpush2.bf16.msra.mxu0 0
    %1676 = vmatprep.subr.bf16.mxu0 0
    %1677 = vmatpush2.bf16.msra.mxu0 0
    %1678 = vmatprep.subr.bf16.mxu0 0
    %1679 = vmatpush2.bf16.msra.mxu0 0
    %1680 = vmatprep.subr.bf16.mxu0 0
    %1681 = vmatpush2.bf16.msra.mxu0 0
    %1682 = vmatprep.subr.bf16.mxu0 0
    %1683 = vmatpush2.bf16.msra.mxu0 0
    %1684 = vmatprep.subr.bf16.mxu0 0
    %1685 = vmatpush2.bf16.msra.mxu0 0
    %1686 = vmatprep.subr.bf16.mxu0 0
    %1687 = vmatpush2.bf16.msra.mxu0 0
    %1688 = vmatprep.mubr.bf16.mxu0 0
    %1689 = vmatmul.mubr.bf16.gmra.mxu0 %v1654
    %v1690 = vpop.f32.mrf.mxu0
    %v1691 = vadd.f32 %v278, %v1690
    %v1692 = vpop.f32.mrf.mxu0
    %v1693 = vpop.f32.mrf.mxu0
    %v1694 = vpop.f32.mrf.mxu0
    %1695 = vdwg.mxu0
    %v1696 = vpack.c.bf16 %v1573, %v1573
    %1698 = vrot.lane.b32.xlu0 %v1696, 64
    %v1699 = vpop.permute.xlu0 %1698
    %v1701 = vsel %vm306, %v1699, 0
    %1703 = vmatprep.subr.bf16.mxu0 0
    %1704 = vmatpush1.bf16.msra.mxu0 0
    %1705 = vmatprep.subr.bf16.mxu0 0
    %1706 = vmatpush1.bf16.msra.mxu0 0
    %1707 = vmatprep.subr.bf16.mxu0 0
    %1708 = vmatpush1.bf16.msra.mxu0 0
    %1709 = vmatprep.subr.bf16.mxu0 0
    %1710 = vmatpush1.bf16.msra.mxu0 0
    %1711 = vmatprep.subr.bf16.mxu0 0
    %1712 = vmatpush1.bf16.msra.mxu0 0
    %1713 = vmatprep.subr.bf16.mxu0 0
    %1714 = vmatpush1.bf16.msra.mxu0 0
    %1715 = vmatprep.subr.bf16.mxu0 0
    %1716 = vmatpush1.bf16.msra.mxu0 %v271
    %1717 = vmatprep.subr.bf16.mxu0 0
    %1718 = vmatpush1.bf16.msra.mxu0 %v270
    %1719 = vmatprep.subr.bf16.mxu0 0
    %1720 = vmatpush2.bf16.msra.mxu0 0
    %1721 = vmatprep.subr.bf16.mxu0 0
    %1722 = vmatpush2.bf16.msra.mxu0 0
    %1723 = vmatprep.subr.bf16.mxu0 0
    %1724 = vmatpush2.bf16.msra.mxu0 0
    %1725 = vmatprep.subr.bf16.mxu0 0
    %1726 = vmatpush2.bf16.msra.mxu0 0
    %1727 = vmatprep.subr.bf16.mxu0 0
    %1728 = vmatpush2.bf16.msra.mxu0 0
    %1729 = vmatprep.subr.bf16.mxu0 0
    %1730 = vmatpush2.bf16.msra.mxu0 0
    %1731 = vmatprep.subr.bf16.mxu0 0
    %1732 = vmatpush2.bf16.msra.mxu0 0
    %1733 = vmatprep.subr.bf16.mxu0 0
    %1734 = vmatpush2.bf16.msra.mxu0 0
    %1735 = vmatprep.mubr.bf16.mxu0 0
    %1736 = vmatmul.mubr.bf16.gmra.mxu0 %v1701
    %v1737 = vpop.f32.mrf.mxu0
    %v1738 = vadd.f32 %v293, %v1737
    %v1739 = vpop.f32.mrf.mxu0
    %v1740 = vpop.f32.mrf.mxu0
    %v1741 = vpop.f32.mrf.mxu0
    %1742 = vdwg.mxu0
    %v1743 = vadd.f32 %v1691, %v1738
    %v1744 = vxor.u32 %v1743, 2147483648
    %v1745 = vmul.f32 %v1744, 1.442695
    %v1746 = vpow.pop %v1745
    %v1747 = vadd.f32 %v1746, 1.0
    %v1748 = vrcp.pop %v1747
    %v1749 = vmul.f32 1.0, %v1748
    %1751 = vrot.lane.b32.xlu0 %v1738, 64
    %v1752 = vpop.permute.xlu0 %1751
    %v1754 = vmul.f32 %v1749, %v1752
    %1756 = vrot.lane.b32.xlu0 %v1754, 64
    %v1757 = vpop.permute.xlu0 %1756
    %v1759 = vadd.f32 %v1691, %v1757
    %v1760 = vtanh.pop %v1759
    %v1761 = vsub.f32 %v1573, %v1760
    %1763 = vrot.lane.b32.xlu0 %v1761, 96
    %v1764 = vpop.permute.xlu0 %1763
    %v1766 = vmul.f32 %v1749, %v1764
    %1768 = vrot.lane.b32.xlu0 %v1766, 32
    %v1769 = vpop.permute.xlu0 %1768
    %v1771 = vadd.f32 %v1760, %v1769
    %v1772 = vsel %vm1647, %v1771, %v1573
    %1773 = vmatprep.subr.bf16.mxu0 0
    %1774 = vmatpush1.bf16.msra.mxu0 0
    %1775 = vmatprep.subr.bf16.mxu0 0
    %1776 = vmatpush1.bf16.msra.mxu0 0
    %1777 = vmatprep.subr.bf16.mxu0 0
    %1778 = vmatpush1.bf16.msra.mxu0 0
    %1779 = vmatprep.subr.bf16.mxu0 0
    %1780 = vmatpush1.bf16.msra.mxu0 0
    %1781 = vmatprep.subr.bf16.mxu0 0
    %1782 = vmatpush1.bf16.msra.mxu0 0
    %1783 = vmatprep.subr.bf16.mxu0 0
    %1784 = vmatpush1.bf16.msra.mxu0 0
    %1785 = vmatprep.subr.bf16.mxu0 0
    %1786 = vmatpush1.bf16.msra.mxu0 %v264
    %1787 = vmatprep.subr.bf16.mxu0 0
    %1788 = vmatpush1.bf16.msra.mxu0 %v263
    %1789 = vmatprep.subr.bf16.mxu0 0
    %1790 = vmatpush2.bf16.msra.mxu0 0
    %1791 = vmatprep.subr.bf16.mxu0 0
    %1792 = vmatpush2.bf16.msra.mxu0 0
    %1793 = vmatprep.subr.bf16.mxu0 0
    %1794 = vmatpush2.bf16.msra.mxu0 0
    %1795 = vmatprep.subr.bf16.mxu0 0
    %1796 = vmatpush2.bf16.msra.mxu0 0
    %1797 = vmatprep.subr.bf16.mxu0 0
    %1798 = vmatpush2.bf16.msra.mxu0 0
    %1799 = vmatprep.subr.bf16.mxu0 0
    %1800 = vmatpush2.bf16.msra.mxu0 0
    %1801 = vmatprep.subr.bf16.mxu0 0
    %1802 = vmatpush2.bf16.msra.mxu0 0
    %1803 = vmatprep.subr.bf16.mxu0 0
    %1804 = vmatpush2.bf16.msra.mxu0 0
    %1805 = vmatprep.mubr.bf16.mxu0 0
    %1806 = vmatmul.mubr.bf16.gmra.mxu0 %v1654
    %v1807 = vpop.f32.mrf.mxu0
    %v1808 = vadd.f32 %v285, %v1807
    %v1809 = vpop.f32.mrf.mxu0
    %v1810 = vpop.f32.mrf.mxu0
    %v1811 = vpop.f32.mrf.mxu0
    %1812 = vdwg.mxu0
    %v1813 = vadd.f32 %v381, %v1808
    %v1814 = vxor.u32 %v1813, 2147483648
    %v1815 = vmul.f32 %v1814, 1.442695
    %v1816 = vpow.pop %v1815
    %v1817 = vadd.f32 %v1816, 1.0
    %v1818 = vrcp.pop %v1817
    %v1819 = vmul.f32 1.0, %v1818
    %1821 = vrot.lane.b32.xlu0 %v1808, 64
    %v1822 = vpop.permute.xlu0 %1821
    %v1824 = vmul.f32 %v1819, %v1822
    %1826 = vrot.lane.b32.xlu0 %v1824, 64
    %v1827 = vpop.permute.xlu0 %1826
    %v1829 = vadd.f32 %v381, %v1827
    %v1830 = vtanh.pop %v1829
    %v1831 = vsub.f32 %v1648, %v1830
    %1833 = vrot.lane.b32.xlu0 %v1831, 96
    %v1834 = vpop.permute.xlu0 %1833
    %v1836 = vmul.f32 %v1819, %v1834
    %1838 = vrot.lane.b32.xlu0 %v1836, 32
    %v1839 = vpop.permute.xlu0 %1838
    %v1841 = vadd.f32 %v1830, %v1839
    %v1842 = vsel %vm245, 1, 0
    %1843 = vset.pattern.permute.xlu0 0
    %1844 = vperm.xlu0 %1843, %v1842
    %v1845 = vpop.permute.xlu0 %1844
    %vm1846 = vcmp.eq.s32.totalorder %v1845, 1
    %v1847 = vsel %vm1846, %v1841, %v1648
    %v1848 = vpack.c.bf16 %v1847, %v1847
    %1850 = vrot.lane.b32.xlu0 %v1848, 64
    %v1851 = vpop.permute.xlu0 %1850
    %v1853 = vsel %vm306, %v1851, 0
    %1855 = vmatprep.subr.bf16.mxu0 0
    %1856 = vmatpush1.bf16.msra.mxu0 0
    %1857 = vmatprep.subr.bf16.mxu0 0
    %1858 = vmatpush1.bf16.msra.mxu0 0
    %1859 = vmatprep.subr.bf16.mxu0 0
    %1860 = vmatpush1.bf16.msra.mxu0 0
    %1861 = vmatprep.subr.bf16.mxu0 0
    %1862 = vmatpush1.bf16.msra.mxu0 0
    %1863 = vmatprep.subr.bf16.mxu0 0
    %1864 = vmatpush1.bf16.msra.mxu0 0
    %1865 = vmatprep.subr.bf16.mxu0 0
    %1866 = vmatpush1.bf16.msra.mxu0 0
    %1867 = vmatprep.subr.bf16.mxu0 0
    %1868 = vmatpush1.bf16.msra.mxu0 %v258
    %1869 = vmatprep.subr.bf16.mxu0 0
    %1870 = vmatpush1.bf16.msra.mxu0 %v257
    %1871 = vmatprep.subr.bf16.mxu0 0
    %1872 = vmatpush2.bf16.msra.mxu0 0
    %1873 = vmatprep.subr.bf16.mxu0 0
    %1874 = vmatpush2.bf16.msra.mxu0 0
    %1875 = vmatprep.subr.bf16.mxu0 0
    %1876 = vmatpush2.bf16.msra.mxu0 0
    %1877 = vmatprep.subr.bf16.mxu0 0
    %1878 = vmatpush2.bf16.msra.mxu0 0
    %1879 = vmatprep.subr.bf16.mxu0 0
    %1880 = vmatpush2.bf16.msra.mxu0 0
    %1881 = vmatprep.subr.bf16.mxu0 0
    %1882 = vmatpush2.bf16.msra.mxu0 0
    %1883 = vmatprep.subr.bf16.mxu0 0
    %1884 = vmatpush2.bf16.msra.mxu0 0
    %1885 = vmatprep.subr.bf16.mxu0 0
    %1886 = vmatpush2.bf16.msra.mxu0 0
    %1887 = vmatprep.mubr.bf16.mxu0 0
    %1888 = vmatmul.mubr.bf16.gmra.mxu0 %v1853
    %v1889 = vpop.f32.mrf.mxu0
    %v1890 = vadd.f32 %v278, %v1889
    %v1891 = vpop.f32.mrf.mxu0
    %v1892 = vpop.f32.mrf.mxu0
    %v1893 = vpop.f32.mrf.mxu0
    %1894 = vdwg.mxu0
    %v1895 = vpack.c.bf16 %v1772, %v1772
    %1897 = vrot.lane.b32.xlu0 %v1895, 64
    %v1898 = vpop.permute.xlu0 %1897
    %v1900 = vsel %vm306, %v1898, 0
    %1902 = vmatprep.subr.bf16.mxu0 0
    %1903 = vmatpush1.bf16.msra.mxu0 0
    %1904 = vmatprep.subr.bf16.mxu0 0
    %1905 = vmatpush1.bf16.msra.mxu0 0
    %1906 = vmatprep.subr.bf16.mxu0 0
    %1907 = vmatpush1.bf16.msra.mxu0 0
    %1908 = vmatprep.subr.bf16.mxu0 0
    %1909 = vmatpush1.bf16.msra.mxu0 0
    %1910 = vmatprep.subr.bf16.mxu0 0
    %1911 = vmatpush1.bf16.msra.mxu0 0
    %1912 = vmatprep.subr.bf16.mxu0 0
    %1913 = vmatpush1.bf16.msra.mxu0 0
    %1914 = vmatprep.subr.bf16.mxu0 0
    %1915 = vmatpush1.bf16.msra.mxu0 %v271
    %1916 = vmatprep.subr.bf16.mxu0 0
    %1917 = vmatpush1.bf16.msra.mxu0 %v270
    %1918 = vmatprep.subr.bf16.mxu0 0
    %1919 = vmatpush2.bf16.msra.mxu0 0
    %1920 = vmatprep.subr.bf16.mxu0 0
    %1921 = vmatpush2.bf16.msra.mxu0 0
    %1922 = vmatprep.subr.bf16.mxu0 0
    %1923 = vmatpush2.bf16.msra.mxu0 0
    %1924 = vmatprep.subr.bf16.mxu0 0
    %1925 = vmatpush2.bf16.msra.mxu0 0
    %1926 = vmatprep.subr.bf16.mxu0 0
    %1927 = vmatpush2.bf16.msra.mxu0 0
    %1928 = vmatprep.subr.bf16.mxu0 0
    %1929 = vmatpush2.bf16.msra.mxu0 0
    %1930 = vmatprep.subr.bf16.mxu0 0
    %1931 = vmatpush2.bf16.msra.mxu0 0
    %1932 = vmatprep.subr.bf16.mxu0 0
    %1933 = vmatpush2.bf16.msra.mxu0 0
    %1934 = vmatprep.mubr.bf16.mxu0 0
    %1935 = vmatmul.mubr.bf16.gmra.mxu0 %v1900
    %v1936 = vpop.f32.mrf.mxu0
    %v1937 = vadd.f32 %v293, %v1936
    %v1938 = vpop.f32.mrf.mxu0
    %v1939 = vpop.f32.mrf.mxu0
    %v1940 = vpop.f32.mrf.mxu0
    %1941 = vdwg.mxu0
    %v1942 = vadd.f32 %v1890, %v1937
    %v1943 = vxor.u32 %v1942, 2147483648
    %v1944 = vmul.f32 %v1943, 1.442695
    %v1945 = vpow.pop %v1944
    %v1946 = vadd.f32 %v1945, 1.0
    %v1947 = vrcp.pop %v1946
    %v1948 = vmul.f32 1.0, %v1947
    %1950 = vrot.lane.b32.xlu0 %v1937, 64
    %v1951 = vpop.permute.xlu0 %1950
    %v1953 = vmul.f32 %v1948, %v1951
    %1955 = vrot.lane.b32.xlu0 %v1953, 64
    %v1956 = vpop.permute.xlu0 %1955
    %v1958 = vadd.f32 %v1890, %v1956
    %v1959 = vtanh.pop %v1958
    %v1960 = vsub.f32 %v1772, %v1959
    %1962 = vrot.lane.b32.xlu0 %v1960, 96
    %v1963 = vpop.permute.xlu0 %1962
    %v1965 = vmul.f32 %v1948, %v1963
    %1967 = vrot.lane.b32.xlu0 %v1965, 32
    %v1968 = vpop.permute.xlu0 %1967
    %v1970 = vadd.f32 %v1959, %v1968
    %v1971 = vsel %vm1846, %v1970, %v1772
    %v1972 = vld [vmem:[%s7] sm:$0xff]
    %v1973 = vld [vmem:[%s7 + $0x8] sm:$0xff]
    %v1974 = vld [vmem:[%s7 + $0x10] sm:$0xff]
    %v1975 = vld [vmem:[%s7 + $0x18] sm:$0xff]
    %v1976 = vld [vmem:[%s8] sm:$0x1]
    %v1978 = vlaneseq
    %v1979 = vshrl.u32 %v1978, 7
    %v1980 = vsub.s32 0, %v1979
    %v1981 = vrot.slane %v1976, %v1980
    %1984 = vrot.lane.b32.xlu0 %v1971, 64
    %v1985 = vpop.permute.xlu0 %1984
    %v1986 = vsel %vm306, %v1985, 0
    %1988 = vmatprep.subr.mxu0 0.0
    %1989 = vmatpush1.msra.mxu0 0.0
    %1990 = vmatprep.subr.mxu0 0.0
    %1991 = vmatpush1.msra.mxu0 0.0
    %1992 = vmatprep.subr.mxu0 0.0
    %1993 = vmatpush1.msra.mxu0 0.0
    %1994 = vmatprep.subr.mxu0 0.0
    %1995 = vmatpush1.msra.mxu0 0.0
    %1996 = vmatprep.subr.mxu0 0.0
    %1997 = vmatpush1.msra.mxu0 0.0
    %1998 = vmatprep.subr.mxu0 0.0
    %1999 = vmatpush1.msra.mxu0 0.0
    %2000 = vmatprep.subr.mxu0 0.0
    %2001 = vmatpush1.msra.mxu0 0.0
    %2002 = vmatprep.subr.mxu0 0.0
    %2003 = vmatpush1.msra.mxu0 0.0
    %2004 = vmatprep.subr.mxu0 0.0
    %2005 = vmatpush1.msra.mxu0 0.0
    %2006 = vmatprep.subr.mxu0 0.0
    %2007 = vmatpush1.msra.mxu0 0.0
    %2008 = vmatprep.subr.mxu0 0.0
    %2009 = vmatpush1.msra.mxu0 0.0
    %2010 = vmatprep.subr.mxu0 0.0
    %2011 = vmatpush1.msra.mxu0 0.0
    %2012 = vmatprep.subr.mxu0 0.0
    %2013 = vmatpush1.msra.mxu0 %v1975
    %2014 = vmatprep.subr.mxu0 0.0
    %2015 = vmatpush1.msra.mxu0 %v1974
    %2016 = vmatprep.subr.mxu0 0.0
    %2017 = vmatpush1.msra.mxu0 %v1973
    %2018 = vmatprep.subr.mxu0 0.0
    %2019 = vmatpush1.msra.mxu0 %v1972
    %2020 = vmatprep.subr.mxu0 0.0
    %2021 = vmatpush2.msra.mxu0 0.0
    %2022 = vmatprep.subr.mxu0 0.0
    %2023 = vmatpush2.msra.mxu0 0.0
    %2024 = vmatprep.subr.mxu0 0.0
    %2025 = vmatpush2.msra.mxu0 0.0
    %2026 = vmatprep.subr.mxu0 0.0
    %2027 = vmatpush2.msra.mxu0 0.0
    %2028 = vmatprep.subr.mxu0 0.0
    %2029 = vmatpush2.msra.mxu0 0.0
    %2030 = vmatprep.subr.mxu0 0.0
    %2031 = vmatpush2.msra.mxu0 0.0
    %2032 = vmatprep.subr.mxu0 0.0
    %2033 = vmatpush2.msra.mxu0 0.0
    %2034 = vmatprep.subr.mxu0 0.0
    %2035 = vmatpush2.msra.mxu0 0.0
    %2036 = vmatprep.subr.mxu0 0.0
    %2037 = vmatpush2.msra.mxu0 0.0
    %2038 = vmatprep.subr.mxu0 0.0
    %2039 = vmatpush2.msra.mxu0 0.0
    %2040 = vmatprep.subr.mxu0 0.0
    %2041 = vmatpush2.msra.mxu0 0.0
    %2042 = vmatprep.subr.mxu0 0.0
    %2043 = vmatpush2.msra.mxu0 0.0
    %2044 = vmatprep.subr.mxu0 0.0
    %2045 = vmatpush2.msra.mxu0 0.0
    %2046 = vmatprep.subr.mxu0 0.0
    %2047 = vmatpush2.msra.mxu0 0.0
    %2048 = vmatprep.subr.mxu0 0.0
    %2049 = vmatpush2.msra.mxu0 0.0
    %2050 = vmatprep.subr.mxu0 0.0
    %2051 = vmatpush2.msra.mxu0 0.0
    %2052 = vmatprep.mubr.f32.mxu0 0.0
    %2053 = vmatmul.mubr.f32.gmra.mxu0 %v1986
    %v2054 = vpop.f32.mrf.mxu0
    %v2055 = vadd.f32 %v1981, %v2054
    %v2056 = vpop.f32.mrf.mxu0
    %2057 = vdwg.mxu0
    %vm2058 = vcmask 31744
    %2059 = vst.msk [vmem:[%s9] sm:$0xff] %vm2058, %v2055
    // Predicated region
    $region42: #{tpu_custom_call.1} parent=1 // pred_check
      _
    $region43: #{tpu_custom_call.1} parent=1 // pred_check_branch
      %2061 = sbr.rel (0) target = $region45
    $region44: #{tpu_custom_call.1} parent=1 // pred_region
      _
    $region45: #{tpu_custom_call.1} parent=1 // pred_fallthru
      _
    // Predicated region
    $region46: #{tpu_custom_call.1} parent=1 // pred_check
      _
    $region47: #{tpu_custom_call.1} parent=1 // pred_check_branch
      %2063 = sbr.rel (0) target = $region49
    $region48: #{tpu_custom_call.1} parent=1 // pred_region
      _
    $region49: #{tpu_custom_call.1} parent=1 // pred_fallthru
      _
    %2064 = vsyncpa [#allocation3], 1

</llo_original>
